<compile_context>
chip_gen: v6e
topology: v6e:2x2x1
jax: 0.10.0
libtpu: 0.0.40
codegen_flags: <defaults>
</compile_context>

<pallas_src>
import functools

import jax
import jax.numpy as jnp
from jax import lax
from jax.experimental import pallas as pl
from jax.experimental.pallas import tpu as pltpu


# ----------------------------------------------------------------------------
# Pallas kernel: both octave branches for one batch sample per grid step.
# ----------------------------------------------------------------------------
def _first_octave_kernel(ch_ref, cl_ref, wh_ref, wl_ref, oh_ref, ol_ref, *,
                         k, wout_h, wout_l):
    # ----- high-frequency branch: X_h = conv_k(x) ---------------------------
    xh = ch_ref[0]                       # ((H+2p)*Wout_h, k*Cin)  bf16
    m_h = oh_ref.shape[1]                # Hout_h * Wout_h
    acc_h = None
    for dy in range(k):                  # static unroll over vertical taps
        # Full-height matmul (bf16 operands, f32 accumulate on the MXU, lane-
        # dense 128-wide N); the tap window is then sliced from the f32
        # result, so every slice start (dy * Wout) is 8-sublane aligned
        # regardless of the bf16 input packing.
        tap = jnp.dot(xh, wh_ref[dy], preferred_element_type=jnp.float32)
        win = tap[dy * wout_h: dy * wout_h + m_h, :]
        acc_h = win if acc_h is None else acc_h + win
    oh_ref[0] = acc_h                    # unmasked vst: last dim is 128-mult

    # ----- low-frequency branch: X_l = conv_k(avgpool2(x)) ------------------
    xl = cl_ref[0]                       # ((H/2+2p)*Wout_l, k*Cin)  bf16
    m_l = ol_ref.shape[1]
    acc_l = None
    for dy in range(k):
        tap = jnp.dot(xl, wl_ref[dy], preferred_element_type=jnp.float32)
        win = tap[dy * wout_l: dy * wout_l + m_l, :]
        acc_l = win if acc_l is None else acc_l + win
    ol_ref[0] = acc_l


# ----------------------------------------------------------------------------
# XLA-side prep (cheap glue; all heavy lifting is inside the kernel)
# ----------------------------------------------------------------------------
def _round_up(v, m):
    return (v + m - 1) // m * m


def _avgpool2(x_nhwc):
    n, h, w, c = x_nhwc.shape
    return x_nhwc.reshape(n, h // 2, 2, w // 2, 2, c).mean(axis=(2, 4))


def _horizontal_unfold(x_nhwc, k, pad):
    """(N,H,W,C) -> (N, (H+2p)*Wout, k*C): pad + k-wide horizontal unfold,
    flattened so the kernel's k vertical taps are contiguous row windows."""
    n, h, w, c = x_nhwc.shape
    xp = jnp.pad(x_nhwc, ((0, 0), (pad, pad), (pad, pad), (0, 0)))
    w_out = w + 2 * pad - k + 1
    cols = jnp.concatenate([xp[:, :, dx:dx + w_out, :] for dx in range(k)],
                           axis=-1)                    # (N, H+2p, Wout, k*C)
    return cols.reshape(n, (h + 2 * pad) * w_out, k * c)


def _prep_weight(w_oihw, c_pad):
    """torch OIHW (Cout, Cin, k, k) -> (k, k*Cin, c_pad): [dy, dx*Cin + c, o],
    zero-padded along the output-channel axis to a lane-dense width."""
    cout, cin, kh, kw = w_oihw.shape
    w = jnp.transpose(w_oihw, (2, 3, 1, 0)).reshape(kh, kw * cin, cout)
    return jnp.pad(w, ((0, 0), (0, 0), (0, c_pad - cout)))


# ----------------------------------------------------------------------------
# Module forward
# ----------------------------------------------------------------------------
def first_octave_conv(x_nchw, w_h2h_oihw, w_h2l_oihw, *, kernel_size=(3, 3),
                      padding=1, stride=1):
    k = kernel_size[0]
    x = jnp.transpose(x_nchw, (0, 2, 3, 1)).astype(jnp.float32)     # NHWC
    if stride == 2:                                                 # torch branch
        x = _avgpool2(x)
    x_low = _avgpool2(x)                                            # h2g_pool

    n, h, w, cin = x.shape
    h_low, w_low = x_low.shape[1], x_low.shape[2]
    hout_h = h + 2 * padding - k + 1
    wout_h = w + 2 * padding - k + 1
    hout_l = h_low + 2 * padding - k + 1
    wout_l = w_low + 2 * padding - k + 1
    c_h = w_h2h_oihw.shape[0]
    c_l = w_h2l_oihw.shape[0]
    # Lane-dense output-channel widths (multiple of 128): unmasked stores and
    # full-width MXU column groups; padding is sliced off in the wrapper.
    c_h_pad = _round_up(c_h, 128)
    c_l_pad = _round_up(c_l, 128)
    kc = k * cin

    cols_h = _horizontal_unfold(x, k, padding).astype(jnp.bfloat16)
    cols_l = _horizontal_unfold(x_low, k, padding).astype(jnp.bfloat16)
    w_h_mat = _prep_weight(w_h2h_oihw, c_h_pad).astype(jnp.bfloat16)
    w_l_mat = _prep_weight(w_h2l_oihw, c_l_pad).astype(jnp.bfloat16)

    rows_h = cols_h.shape[1]            # (h + 2p) * wout_h
    rows_l = cols_l.shape[1]            # (h_low + 2p) * wout_l

    kernel = functools.partial(_first_octave_kernel, k=k,
                               wout_h=wout_h, wout_l=wout_l)

    out_h_flat, out_l_flat = pl.pallas_call(
        kernel,
        out_shape=(
            jax.ShapeDtypeStruct((n, hout_h * wout_h, c_h_pad), jnp.float32),
            jax.ShapeDtypeStruct((n, hout_l * wout_l, c_l_pad), jnp.float32),
        ),
        grid_spec=pltpu.PrefetchScalarGridSpec(
            num_scalar_prefetch=0,
            grid=(n,),
            in_specs=[
                pl.BlockSpec((1, rows_h, kc), lambda b: (b, 0, 0)),
                pl.BlockSpec((1, rows_l, kc), lambda b: (b, 0, 0)),
                pl.BlockSpec((k, kc, c_h_pad), lambda b: (0, 0, 0)),  # resident
                pl.BlockSpec((k, kc, c_l_pad), lambda b: (0, 0, 0)),  # resident
            ],
            out_specs=[
                pl.BlockSpec((1, hout_h * wout_h, c_h_pad), lambda b: (b, 0, 0)),
                pl.BlockSpec((1, hout_l * wout_l, c_l_pad), lambda b: (b, 0, 0)),
            ],
        ),
        compiler_params=pltpu.CompilerParams(
            dimension_semantics=("parallel",)),
    )(cols_h, cols_l, w_h_mat, w_l_mat)

    x_h = out_h_flat[..., :c_h].reshape(n, hout_h, wout_h, c_h)
    x_l = out_l_flat[..., :c_l].reshape(n, hout_l, wout_l, c_l)
    return x_h.transpose(0, 3, 1, 2), x_l.transpose(0, 3, 1, 2)


# ----------------------------------------------------------------------------
# Demo / self-check
# ----------------------------------------------------------------------------
if __name__ == "__main__":
    N, Cin, H, W = 2, 4, 16, 16
    out_channels, alpha = 8, 0.5
    kernel_size, padding = (3, 3), 1
    c_l = int(alpha * out_channels)          # -> h2l out channels
    c_h = out_channels - c_l                 # -> h2h out channels

    key = jax.random.PRNGKey(0)
    kx, kwh, kwl = jax.random.split(key, 3)
    x = jax.random.normal(kx, (N, Cin, H, W), jnp.float32)               # NCHW
    w_h2h = 0.1 * jax.random.normal(kwh, (c_h, Cin, 3, 3), jnp.float32)  # OIHW
    w_h2l = 0.1 * jax.random.normal(kwl, (c_l, Cin, 3, 3), jnp.float32)

    fn = jax.jit(functools.partial(first_octave_conv, kernel_size=kernel_size,
                                   padding=padding, stride=1))
    x_h, x_l = fn(x, w_h2h, w_h2l)
    x_h = jax.block_until_ready(x_h)
    x_l = jax.block_until_ready(x_l)

    assert x_h.shape == (N, c_h, H, W), x_h.shape
    assert x_l.shape == (N, c_l, H // 2, W // 2), x_l.shape

    # Pure-JAX reference (mirrors the kernel's bf16 operand rounding, f32 math).
    def ref_conv(inp_nhwc, w_oihw):
        lhs = inp_nhwc.astype(jnp.bfloat16).astype(jnp.float32)
        rhs = w_oihw.astype(jnp.bfloat16).astype(jnp.float32)
        return lax.conv_general_dilated(
            lhs, rhs, window_strides=(1, 1),
            padding=((padding, padding), (padding, padding)),
            dimension_numbers=("NHWC", "OIHW", "NHWC"),
            precision=lax.Precision.HIGHEST)

    x_nhwc = jnp.transpose(x, (0, 2, 3, 1))
    pooled = _avgpool2(x_nhwc)
    ref_h = jnp.transpose(ref_conv(x_nhwc, w_h2h), (0, 3, 1, 2))
    ref_l = jnp.transpose(ref_conv(pooled, w_h2l), (0, 3, 1, 2))
    assert jnp.allclose(x_h, ref_h, atol=1e-3, rtol=1e-3), \
        float(jnp.max(jnp.abs(x_h - ref_h)))
    assert jnp.allclose(x_l, ref_l, atol=1e-3, rtol=1e-3), \
        float(jnp.max(jnp.abs(x_l - ref_l)))

    print("KERNEL_OK")
</pallas_src>

<mosaic_0001>
module attributes {stable_mosaic.version = 11 : i64} {
  func.func @_first_octave_kernel(%arg0: i32, %arg1: memref<1x288x12xbf16, #tpu.memory_space<vmem>>, %arg2: memref<1x80x12xbf16, #tpu.memory_space<vmem>>, %arg3: memref<3x12x128xbf16, #tpu.memory_space<vmem>>, %arg4: memref<3x12x128xbf16, #tpu.memory_space<vmem>>, %arg5: memref<1x256x128xf32, #tpu.memory_space<vmem>>, %arg6: memref<1x64x128xf32, #tpu.memory_space<vmem>>) attributes {dimension_semantics = [#tpu.dimension_semantics<parallel>], iteration_bounds = array<i64: 2>, scalar_prefetch = 0 : i64, scratch_operands = 0 : i64, tpu.core_type = #tpu.core_type<tc>, window_params = [{transform_indices = @transform_0, window_bounds = array<i64: 1, 288, 12>}, {transform_indices = @transform_1, window_bounds = array<i64: 1, 80, 12>}, {pipeline_mode = #tpu.pipeline_mode<synchronous>, transform_indices = @transform_2, window_bounds = array<i64: 3, 12, 128>}, {pipeline_mode = #tpu.pipeline_mode<synchronous>, transform_indices = @transform_3, window_bounds = array<i64: 3, 12, 128>}, {transform_indices = @transform_4, window_bounds = array<i64: 1, 256, 128>}, {transform_indices = @transform_5, window_bounds = array<i64: 1, 64, 128>}]} {
    %c0 = arith.constant 0 : index
    %c0_0 = arith.constant 0 : index
    %c0_1 = arith.constant 0 : index
    %0 = vector.load %arg1[%c0, %c0_0, %c0_1] : memref<1x288x12xbf16, #tpu.memory_space<vmem>>, vector<1x288x12xbf16>
    %1 = vector.shape_cast %0 : vector<1x288x12xbf16> to vector<288x12xbf16>
    %c0_2 = arith.constant 0 : index
    %c0_3 = arith.constant 0 : index
    %c0_4 = arith.constant 0 : index
    %2 = vector.load %arg3[%c0_2, %c0_3, %c0_4] : memref<3x12x128xbf16, #tpu.memory_space<vmem>>, vector<1x12x128xbf16>
    %3 = vector.shape_cast %2 : vector<1x12x128xbf16> to vector<12x128xbf16>
    %cst = arith.constant dense<0.000000e+00> : vector<288x128xf32>
    %4 = tpu.matmul %1, %3, %cst {dimension_numbers = #tpu.dot_dimension_numbers<[1], [0], [0], [1], [0, 0, 1, 1], [], []>} : vector<288x12xbf16>, vector<12x128xbf16>, vector<288x128xf32> -> vector<288x128xf32>
    %5 = vector.extract_strided_slice %4 {offsets = [0, 0], sizes = [256, 128], strides = [1, 1]} : vector<288x128xf32> to vector<256x128xf32>
    %c1 = arith.constant 1 : index
    %c0_5 = arith.constant 0 : index
    %c0_6 = arith.constant 0 : index
    %6 = vector.load %arg3[%c1, %c0_5, %c0_6] : memref<3x12x128xbf16, #tpu.memory_space<vmem>>, vector<1x12x128xbf16>
    %7 = vector.shape_cast %6 : vector<1x12x128xbf16> to vector<12x128xbf16>
    %cst_7 = arith.constant dense<0.000000e+00> : vector<288x128xf32>
    %8 = tpu.matmul %1, %7, %cst_7 {dimension_numbers = #tpu.dot_dimension_numbers<[1], [0], [0], [1], [0, 0, 1, 1], [], []>} : vector<288x12xbf16>, vector<12x128xbf16>, vector<288x128xf32> -> vector<288x128xf32>
    %9 = vector.extract_strided_slice %8 {offsets = [16, 0], sizes = [256, 128], strides = [1, 1]} : vector<288x128xf32> to vector<256x128xf32>
    %10 = arith.addf %5, %9 : vector<256x128xf32>
    %c2 = arith.constant 2 : index
    %c0_8 = arith.constant 0 : index
    %c0_9 = arith.constant 0 : index
    %11 = vector.load %arg3[%c2, %c0_8, %c0_9] : memref<3x12x128xbf16, #tpu.memory_space<vmem>>, vector<1x12x128xbf16>
    %12 = vector.shape_cast %11 : vector<1x12x128xbf16> to vector<12x128xbf16>
    %cst_10 = arith.constant dense<0.000000e+00> : vector<288x128xf32>
    %13 = tpu.matmul %1, %12, %cst_10 {dimension_numbers = #tpu.dot_dimension_numbers<[1], [0], [0], [1], [0, 0, 1, 1], [], []>} : vector<288x12xbf16>, vector<12x128xbf16>, vector<288x128xf32> -> vector<288x128xf32>
    %14 = vector.extract_strided_slice %13 {offsets = [32, 0], sizes = [256, 128], strides = [1, 1]} : vector<288x128xf32> to vector<256x128xf32>
    %15 = arith.addf %10, %14 : vector<256x128xf32>
    %c0_11 = arith.constant 0 : index
    %c0_12 = arith.constant 0 : index
    %c0_13 = arith.constant 0 : index
    %16 = vector.load %arg5[%c0_11, %c0_12, %c0_13] : memref<1x256x128xf32, #tpu.memory_space<vmem>>, vector<1x256x128xf32>
    %17 = vector.shape_cast %16 : vector<1x256x128xf32> to vector<256x128xf32>
    %18 = vector.shape_cast %15 : vector<256x128xf32> to vector<1x256x128xf32>
    tpu.vector_store %arg5[%c0_11, %c0_12, %c0_13], %18 {strides = array<i32>} : memref<1x256x128xf32, #tpu.memory_space<vmem>>, vector<1x256x128xf32>,
    %c0_14 = arith.constant 0 : index
    %c0_15 = arith.constant 0 : index
    %c0_16 = arith.constant 0 : index
    %19 = vector.load %arg2[%c0_14, %c0_15, %c0_16] : memref<1x80x12xbf16, #tpu.memory_space<vmem>>, vector<1x80x12xbf16>
    %20 = vector.shape_cast %19 : vector<1x80x12xbf16> to vector<80x12xbf16>
    %c0_17 = arith.constant 0 : index
    %c0_18 = arith.constant 0 : index
    %c0_19 = arith.constant 0 : index
    %21 = vector.load %arg4[%c0_17, %c0_18, %c0_19] : memref<3x12x128xbf16, #tpu.memory_space<vmem>>, vector<1x12x128xbf16>
    %22 = vector.shape_cast %21 : vector<1x12x128xbf16> to vector<12x128xbf16>
    %cst_20 = arith.constant dense<0.000000e+00> : vector<80x128xf32>
    %23 = tpu.matmul %20, %22, %cst_20 {dimension_numbers = #tpu.dot_dimension_numbers<[1], [0], [0], [1], [0, 0, 1, 1], [], []>} : vector<80x12xbf16>, vector<12x128xbf16>, vector<80x128xf32> -> vector<80x128xf32>
    %24 = vector.extract_strided_slice %23 {offsets = [0, 0], sizes = [64, 128], strides = [1, 1]} : vector<80x128xf32> to vector<64x128xf32>
    %c1_21 = arith.constant 1 : index
    %c0_22 = arith.constant 0 : index
    %c0_23 = arith.constant 0 : index
    %25 = vector.load %arg4[%c1_21, %c0_22, %c0_23] : memref<3x12x128xbf16, #tpu.memory_space<vmem>>, vector<1x12x128xbf16>
    %26 = vector.shape_cast %25 : vector<1x12x128xbf16> to vector<12x128xbf16>
    %cst_24 = arith.constant dense<0.000000e+00> : vector<80x128xf32>
    %27 = tpu.matmul %20, %26, %cst_24 {dimension_numbers = #tpu.dot_dimension_numbers<[1], [0], [0], [1], [0, 0, 1, 1], [], []>} : vector<80x12xbf16>, vector<12x128xbf16>, vector<80x128xf32> -> vector<80x128xf32>
    %28 = vector.extract_strided_slice %27 {offsets = [8, 0], sizes = [64, 128], strides = [1, 1]} : vector<80x128xf32> to vector<64x128xf32>
    %29 = arith.addf %24, %28 : vector<64x128xf32>
    %c2_25 = arith.constant 2 : index
    %c0_26 = arith.constant 0 : index
    %c0_27 = arith.constant 0 : index
    %30 = vector.load %arg4[%c2_25, %c0_26, %c0_27] : memref<3x12x128xbf16, #tpu.memory_space<vmem>>, vector<1x12x128xbf16>
    %31 = vector.shape_cast %30 : vector<1x12x128xbf16> to vector<12x128xbf16>
    %cst_28 = arith.constant dense<0.000000e+00> : vector<80x128xf32>
    %32 = tpu.matmul %20, %31, %cst_28 {dimension_numbers = #tpu.dot_dimension_numbers<[1], [0], [0], [1], [0, 0, 1, 1], [], []>} : vector<80x12xbf16>, vector<12x128xbf16>, vector<80x128xf32> -> vector<80x128xf32>
    %33 = vector.extract_strided_slice %32 {offsets = [16, 0], sizes = [64, 128], strides = [1, 1]} : vector<80x128xf32> to vector<64x128xf32>
    %34 = arith.addf %29, %33 : vector<64x128xf32>
    %c0_29 = arith.constant 0 : index
    %c0_30 = arith.constant 0 : index
    %c0_31 = arith.constant 0 : index
    %35 = vector.load %arg6[%c0_29, %c0_30, %c0_31] : memref<1x64x128xf32, #tpu.memory_space<vmem>>, vector<1x64x128xf32>
    %36 = vector.shape_cast %35 : vector<1x64x128xf32> to vector<64x128xf32>
    %37 = vector.shape_cast %34 : vector<64x128xf32> to vector<1x64x128xf32>
    tpu.vector_store %arg6[%c0_29, %c0_30, %c0_31], %37 {strides = array<i32>} : memref<1x64x128xf32, #tpu.memory_space<vmem>>, vector<1x64x128xf32>,
    return
  }
  func.func @transform_0(%arg0: i32) -> (i32, i32, i32) {
    %c0_i32 = arith.constant 0 : i32
    %c0_i32_0 = arith.constant 0 : i32
    %c0_i32_1 = arith.constant 0 : i32
    return %arg0, %c0_i32, %c0_i32_0 : i32, i32, i32
  }
  func.func @transform_1(%arg0: i32) -> (i32, i32, i32) {
    %c0_i32 = arith.constant 0 : i32
    %c0_i32_0 = arith.constant 0 : i32
    %c0_i32_1 = arith.constant 0 : i32
    return %arg0, %c0_i32, %c0_i32_0 : i32, i32, i32
  }
  func.func @transform_2(%arg0: i32) -> (i32, i32, i32) {
    %c0_i32 = arith.constant 0 : i32
    %c0_i32_0 = arith.constant 0 : i32
    %c0_i32_1 = arith.constant 0 : i32
    %c0_i32_2 = arith.constant 0 : i32
    return %c0_i32, %c0_i32_0, %c0_i32_1 : i32, i32, i32
  }
  func.func @transform_3(%arg0: i32) -> (i32, i32, i32) {
    %c0_i32 = arith.constant 0 : i32
    %c0_i32_0 = arith.constant 0 : i32
    %c0_i32_1 = arith.constant 0 : i32
    %c0_i32_2 = arith.constant 0 : i32
    return %c0_i32, %c0_i32_0, %c0_i32_1 : i32, i32, i32
  }
  func.func @transform_4(%arg0: i32) -> (i32, i32, i32) {
    %c0_i32 = arith.constant 0 : i32
    %c0_i32_0 = arith.constant 0 : i32
    %c0_i32_1 = arith.constant 0 : i32
    return %arg0, %c0_i32, %c0_i32_0 : i32, i32, i32
  }
  func.func @transform_5(%arg0: i32) -> (i32, i32, i32) {
    %c0_i32 = arith.constant 0 : i32
    %c0_i32_0 = arith.constant 0 : i32
    %c0_i32_1 = arith.constant 0 : i32
    return %arg0, %c0_i32, %c0_i32_0 : i32, i32, i32
  }
}

</mosaic_0001>

<llo_original>
// kernel: first_octave_conv.1
$region0: #{first_octave_conv.1}
  #allocation0 [shape = 'u32[]', space=smem, size = 0x4, offset = 0x4, fixed_abs, tag = 'smem constant byte address 0x4 - core index']
  #allocation1 [shape = 'u32[144,128]{1,0:T(1,128)}', space=vmem, size = 0x12000, scoped, tag = 'internal scratch']
  %s0 = inlined_call_operand.vmem [shape: bf16[2,288,12], index: 0, kind: input, shape index: {}]
  %s1 = inlined_call_operand.vmem [shape: bf16[2,80,12], index: 1, kind: input, shape index: {}]
  %s2 = inlined_call_operand.vmem [shape: bf16[3,12,128], index: 2, kind: input, shape index: {}]
  %s3 = inlined_call_operand.vmem [shape: bf16[3,12,128], index: 3, kind: input, shape index: {}]
  %s4 = inlined_call_operand.vmem [shape: f32[2,256,128], index: 4, kind: output, shape index: {0}]
  %s5 = inlined_call_operand.vmem [shape: f32[2,64,128], index: 5, kind: output, shape index: {1}]
  %6 = xla_tuple %s4, %s5
  %s7 = sld [smem:[#allocation0]]
  $region57: #{first_octave_conv.1} parent=0
    _
  %s9 = ssub.s32 1, %s7
  %s10 = scalar_select 0, %s9, %s7
  loop: start=0, step=1, limit=4
  $region2: #{first_octave_conv.1} parent=0 // loop_pre_header
    _
  $region3: #{first_octave_conv.1} parent=0 // loop_header
    %s12 = sphi 0, %s16
    %p13 = scmp.ge.s32.totalorder %s12, 4
    %s22 = sphi 0, %s24
    %s25 = sphi 0, %s22
    %s26 = sphi 0, %s25
    %s42 = sphi 0, %s26
    %s48 = sphi 0, %s50
    %s51 = sphi 0, %s48
    %s52 = sphi 0, %s51
    %s68 = sphi 0, %s52
    %s72 = sphi 0, %s72
    %s74 = sphi 0, %s72
    %s75 = sphi 0, %s74
    %s89 = sphi 0, %s75
    %s93 = sphi 0, %s93
    %s95 = sphi 0, %s93
    %s96 = sphi 0, %s95
    %s110 = sphi 0, %s96
    %s116 = sphi 0, %s118
    %s119 = sphi 0, %s116
    %s120 = sphi 0, %s119
    %s136 = sphi 0, %s120
    %s142 = sphi 0, %s144
    %s145 = sphi 0, %s142
    %s146 = sphi 0, %s145
    %s162 = sphi 0, %s146
  $region4: #{first_octave_conv.1} parent=0 // loop_header_branch
    %15 = sbr.rel (%p13) target = $region8
  $region5: #{first_octave_conv.1} parent=0 // loop_body
    %s17 = ssub.s32 %s12, 1
    %s18 = ssub.s32 %s12, 2
    %s19 = sadd.s32 %s12, 1
    %s20 = ssub.s32 %s12, %s19
    %p21 = scmp.eq.s32.totalorder %s20, 0
    %s23 = sadd.s32 %s22, 1
    %s24 = scalar_select %p21, %s22, %s23
    %p27 = pneg %p21
    %p28 = scmp.eq.s32.totalorder %s12, 1
    %p29 = por %p27, %p28
    %p30 = scmp.ne.s32.totalorder %s22, %s25
    %p31 = scmp.eq.s32.totalorder %s12, 0
    %p32 = por %p30, %p31
    %p33 = scmp.ne.s32.totalorder %s22, %s25
    %p34 = scmp.eq.s32.totalorder %s17, 1
    %p35 = por %p33, %p34
    %p36 = scmp.ne.s32.totalorder %s25, %s26
    %p37 = scmp.eq.s32.totalorder %s17, 0
    %p38 = por %p36, %p37
    %p39 = scmp.ne.s32.totalorder %s25, %s26
    %p40 = scmp.eq.s32.totalorder %s18, 1
    %p41 = por %p39, %p40
    %p43 = scmp.ne.s32.totalorder %s26, %s42
    %p44 = scmp.eq.s32.totalorder %s18, 0
    %p45 = por %p43, %p44
    %s46 = ssub.s32 %s12, %s19
    %p47 = scmp.eq.s32.totalorder %s46, 0
    %s49 = sadd.s32 %s48, 1
    %s50 = scalar_select %p47, %s48, %s49
    %p53 = pneg %p47
    %p54 = scmp.eq.s32.totalorder %s12, 1
    %p55 = por %p53, %p54
    %p56 = scmp.ne.s32.totalorder %s48, %s51
    %p57 = scmp.eq.s32.totalorder %s12, 0
    %p58 = por %p56, %p57
    %p59 = scmp.ne.s32.totalorder %s48, %s51
    %p60 = scmp.eq.s32.totalorder %s17, 1
    %p61 = por %p59, %p60
    %p62 = scmp.ne.s32.totalorder %s51, %s52
    %p63 = scmp.eq.s32.totalorder %s17, 0
    %p64 = por %p62, %p63
    %p65 = scmp.ne.s32.totalorder %s51, %s52
    %p66 = scmp.eq.s32.totalorder %s18, 1
    %p67 = por %p65, %p66
    %p69 = scmp.ne.s32.totalorder %s52, %s68
    %p70 = scmp.eq.s32.totalorder %s18, 0
    %p71 = por %p69, %p70
    %s73 = sadd.s32 %s72, 1
    %p76 = scmp.eq.s32.totalorder %s12, 1
    %p77 = scmp.ne.s32.totalorder %s72, %s74
    %p78 = scmp.eq.s32.totalorder %s12, 0
    %p79 = por %p77, %p78
    %p80 = scmp.ne.s32.totalorder %s72, %s74
    %p81 = scmp.eq.s32.totalorder %s17, 1
    %p82 = por %p80, %p81
    %p83 = scmp.ne.s32.totalorder %s74, %s75
    %p84 = scmp.eq.s32.totalorder %s17, 0
    %p85 = por %p83, %p84
    %p86 = scmp.ne.s32.totalorder %s74, %s75
    %p87 = scmp.eq.s32.totalorder %s18, 1
    %p88 = por %p86, %p87
    %p90 = scmp.ne.s32.totalorder %s75, %s89
    %p91 = scmp.eq.s32.totalorder %s18, 0
    %p92 = por %p90, %p91
    %s94 = sadd.s32 %s93, 1
    %p97 = scmp.eq.s32.totalorder %s12, 1
    %p98 = scmp.ne.s32.totalorder %s93, %s95
    %p99 = scmp.eq.s32.totalorder %s12, 0
    %p100 = por %p98, %p99
    %p101 = scmp.ne.s32.totalorder %s93, %s95
    %p102 = scmp.eq.s32.totalorder %s17, 1
    %p103 = por %p101, %p102
    %p104 = scmp.ne.s32.totalorder %s95, %s96
    %p105 = scmp.eq.s32.totalorder %s17, 0
    %p106 = por %p104, %p105
    %p107 = scmp.ne.s32.totalorder %s95, %s96
    %p108 = scmp.eq.s32.totalorder %s18, 1
    %p109 = por %p107, %p108
    %p111 = scmp.ne.s32.totalorder %s96, %s110
    %p112 = scmp.eq.s32.totalorder %s18, 0
    %p113 = por %p111, %p112
    %s114 = ssub.s32 %s12, %s19
    %p115 = scmp.eq.s32.totalorder %s114, 0
    %s117 = sadd.s32 %s116, 1
    %s118 = scalar_select %p115, %s116, %s117
    %p121 = pneg %p115
    %p122 = scmp.eq.s32.totalorder %s12, 1
    %p123 = por %p121, %p122
    %p124 = scmp.ne.s32.totalorder %s116, %s119
    %p125 = scmp.eq.s32.totalorder %s12, 0
    %p126 = por %p124, %p125
    %p127 = scmp.ne.s32.totalorder %s116, %s119
    %p128 = scmp.eq.s32.totalorder %s17, 1
    %p129 = por %p127, %p128
    %p130 = scmp.ne.s32.totalorder %s119, %s120
    %p131 = scmp.eq.s32.totalorder %s17, 0
    %p132 = por %p130, %p131
    %p133 = scmp.ne.s32.totalorder %s119, %s120
    %p134 = scmp.eq.s32.totalorder %s18, 1
    %p135 = por %p133, %p134
    %p137 = scmp.ne.s32.totalorder %s120, %s136
    %p138 = scmp.eq.s32.totalorder %s18, 0
    %p139 = por %p137, %p138
    %s140 = ssub.s32 %s12, %s19
    %p141 = scmp.eq.s32.totalorder %s140, 0
    %s143 = sadd.s32 %s142, 1
    %s144 = scalar_select %p141, %s142, %s143
    %p147 = pneg %p141
    %p148 = scmp.eq.s32.totalorder %s12, 1
    %p149 = por %p147, %p148
    %p150 = scmp.ne.s32.totalorder %s142, %s145
    %p151 = scmp.eq.s32.totalorder %s12, 0
    %p152 = por %p150, %p151
    %p153 = scmp.ne.s32.totalorder %s142, %s145
    %p154 = scmp.eq.s32.totalorder %s17, 1
    %p155 = por %p153, %p154
    %p156 = scmp.ne.s32.totalorder %s145, %s146
    %p157 = scmp.eq.s32.totalorder %s17, 0
    %p158 = por %p156, %p157
    %p159 = scmp.ne.s32.totalorder %s145, %s146
    %p160 = scmp.eq.s32.totalorder %s18, 1
    %p161 = por %p159, %p160
    %p163 = scmp.ne.s32.totalorder %s146, %s162
    %p164 = scmp.eq.s32.totalorder %s18, 0
    %p165 = por %p163, %p164
    %p166 = scmp.le.s32.totalorder 1, %s12
    %p167 = scmp.lt.s32.totalorder %s12, 3
    %p168 = pnand %p166, %p167
    %p169 = pneg %p168
    // Predicated region
    $region9: #{first_octave_conv.1} parent=5 // pred_check
      _
    $region10: #{first_octave_conv.1} parent=5 // pred_check_branch
      %171 = sbr.rel (%p168) target = $region12
    $region11: #{first_octave_conv.1} parent=5 // pred_region
      %s172 = ssub.s32 %s12, 1
      // Predicated region
      $region13: #{first_octave_conv.1} parent=11 // pred_check
        %p173 = pneg %p85
      $region14: #{first_octave_conv.1} parent=11 // pred_check_branch
        %175 = sbr.rel (%p173) target = $region16
      $region15: #{first_octave_conv.1} parent=11 // pred_region
        _
      $region16: #{first_octave_conv.1} parent=11 // pred_fallthru
        _
      // Predicated region
      $region17: #{first_octave_conv.1} parent=11 // pred_check
        %p176 = pneg %p106
      $region18: #{first_octave_conv.1} parent=11 // pred_check_branch
        %178 = sbr.rel (%p176) target = $region20
      $region19: #{first_octave_conv.1} parent=11 // pred_region
        _
      $region20: #{first_octave_conv.1} parent=11 // pred_fallthru
        _
    $region12: #{first_octave_conv.1} parent=5 // pred_fallthru
      _
    %p179 = scmp.lt.s32.totalorder %s12, 2
    // Predicated region
    $region21: #{first_octave_conv.1} parent=5 // pred_check
      %p180 = pneg %p179
    $region22: #{first_octave_conv.1} parent=5 // pred_check_branch
      %182 = sbr.rel (%p180) target = $region24
    $region23: #{first_octave_conv.1} parent=5 // pred_region
      // Predicated region
      $region25: #{first_octave_conv.1} parent=23 // pred_check
        %p183 = pneg %p32
      $region26: #{first_octave_conv.1} parent=23 // pred_check_branch
        %185 = sbr.rel (%p183) target = $region28
      $region27: #{first_octave_conv.1} parent=23 // pred_region
        %p186 = scmp.lt.s32.totalorder %s12, 1
        %s187 = scalar_select %p186, %s12, 1
        %s188 = smul.addr %s187, 36
        %s189 = smul.addr %s188, 4
        %s190 = scalar_lea.vmem %s0, %s189
      $region28: #{first_octave_conv.1} parent=23 // pred_fallthru
        _
      // Predicated region
      $region29: #{first_octave_conv.1} parent=23 // pred_check
        %p191 = pneg %p58
      $region30: #{first_octave_conv.1} parent=23 // pred_check_branch
        %193 = sbr.rel (%p191) target = $region32
      $region31: #{first_octave_conv.1} parent=23 // pred_region
        %p194 = scmp.lt.s32.totalorder %s12, 1
        %s195 = scalar_select %p194, %s12, 1
        %s196 = smul.addr %s195, 10
        %s197 = smul.addr %s196, 4
        %s198 = scalar_lea.vmem %s1, %s197
      $region32: #{first_octave_conv.1} parent=23 // pred_fallthru
        _
    $region24: #{first_octave_conv.1} parent=5 // pred_fallthru
      _
    %p199 = scmp.le.s32.totalorder 1, %s12
    %p200 = scmp.lt.s32.totalorder %s12, 3
    %p201 = pnand %p199, %p200
    %p202 = pneg %p201
    // Predicated region
    $region33: #{first_octave_conv.1} parent=5 // pred_check
      _
    $region34: #{first_octave_conv.1} parent=5 // pred_check_branch
      %204 = sbr.rel (%p201) target = $region36
    $region35: #{first_octave_conv.1} parent=5 // pred_region
      %s205 = ssub.s32 %s12, 1
      %p206 = scmp.lt.s32.totalorder %s17, 1
      %s207 = scalar_select %p206, %s17, 1
      %s208 = smul.addr %s207, 36
      %s209 = smul.addr %s208, 4
      %s210 = scalar_lea.vmem %s0, %s209
      %p211 = pneg %p38
      %p212 = pneg %p35
      %p213 = scmp.lt.s32.totalorder %s17, 1
      %s214 = scalar_select %p213, %s17, 1
      %s215 = smul.addr %s214, 10
      %s216 = smul.addr %s215, 4
      %s217 = scalar_lea.vmem %s1, %s216
      %p218 = pneg %p64
      %p219 = pneg %p61
      %p220 = pneg %p85
      %p221 = pneg %p82
      %p222 = pneg %p106
      %p223 = pneg %p103
      %p224 = pneg %p132
      %p225 = pneg %p129
      %p226 = scmp.lt.s32.totalorder %s17, 1
      %s227 = scalar_select %p226, %s17, 1
      %s228 = smul.addr %s227, 32
      %s229 = smul.addr %s228, 8
      %s230 = scalar_lea.vmem %s4, %s229
      %p231 = pneg %p158
      %p232 = pneg %p155
      %p233 = scmp.lt.s32.totalorder %s17, 1
      %s234 = scalar_select %p233, %s17, 1
      %s235 = smul.addr %s234, 8
      %s236 = smul.addr %s235, 8
      %s237 = scalar_lea.vmem %s5, %s236
      %p238 = scmp.lt.s32.totalorder %s17, 1
      %s239 = scalar_select %p238, %s17, 1
      %s240 = smul.addr %s239, 36
      %s241 = smul.addr %s240, 4
      %s242 = scalar_lea.vmem %s0, %s241
      %p243 = scmp.lt.s32.totalorder %s17, 1
      %s244 = scalar_select %p243, %s17, 1
      %s245 = smul.addr %s244, 10
      %s246 = smul.addr %s245, 4
      %s247 = scalar_lea.vmem %s1, %s246
      %p248 = scmp.lt.s32.totalorder %s17, 1
      %s249 = scalar_select %p248, %s17, 1
      %s250 = smul.addr %s249, 32
      %s251 = smul.addr %s250, 8
      %s252 = scalar_lea.vmem %s4, %s251
      %p253 = scmp.lt.s32.totalorder %s17, 1
      %s254 = scalar_select %p253, %s17, 1
      %s255 = smul.addr %s254, 8
      %s256 = smul.addr %s255, 8
      %s257 = scalar_lea.vmem %s5, %s256
      %v259 = vld [vmem:[%s242] sm:$0xf]
      %v260 = vld [vmem:[%s242 + $0x4] sm:$0xf]
      %v261 = vld [vmem:[%s242 + $0x8] sm:$0xf]
      %v262 = vld [vmem:[%s242 + $0xc] sm:$0xf]
      %v263 = vld [vmem:[%s242 + $0x10] sm:$0xf]
      %v264 = vld [vmem:[%s242 + $0x14] sm:$0xf]
      %v265 = vld [vmem:[%s242 + $0x18] sm:$0xf]
      %v266 = vld [vmem:[%s242 + $0x1c] sm:$0xf]
      %v267 = vld [vmem:[%s242 + $0x20] sm:$0xf]
      %v268 = vld [vmem:[%s242 + $0x24] sm:$0xf]
      %v269 = vld [vmem:[%s242 + $0x28] sm:$0xf]
      %v270 = vld [vmem:[%s242 + $0x2c] sm:$0xf]
      %v271 = vld [vmem:[%s242 + $0x30] sm:$0xf]
      %v272 = vld [vmem:[%s242 + $0x34] sm:$0xf]
      %v273 = vld [vmem:[%s242 + $0x38] sm:$0xf]
      %v274 = vld [vmem:[%s242 + $0x3c] sm:$0xf]
      %v275 = vld [vmem:[%s242 + $0x40] sm:$0xf]
      %v276 = vld [vmem:[%s242 + $0x44] sm:$0xf]
      %v277 = vld [vmem:[%s242 + $0x48] sm:$0xf]
      %v278 = vld [vmem:[%s242 + $0x4c] sm:$0xf]
      %v279 = vld [vmem:[%s242 + $0x50] sm:$0xf]
      %v280 = vld [vmem:[%s242 + $0x54] sm:$0xf]
      %v281 = vld [vmem:[%s242 + $0x58] sm:$0xf]
      %v282 = vld [vmem:[%s242 + $0x5c] sm:$0xf]
      %v283 = vld [vmem:[%s242 + $0x60] sm:$0xf]
      %v284 = vld [vmem:[%s242 + $0x64] sm:$0xf]
      %v285 = vld [vmem:[%s242 + $0x68] sm:$0xf]
      %v286 = vld [vmem:[%s242 + $0x6c] sm:$0xf]
      %v287 = vld [vmem:[%s242 + $0x70] sm:$0xf]
      %v288 = vld [vmem:[%s242 + $0x74] sm:$0xf]
      %v289 = vld [vmem:[%s242 + $0x78] sm:$0xf]
      %v290 = vld [vmem:[%s242 + $0x7c] sm:$0xf]
      %v291 = vld [vmem:[%s242 + $0x80] sm:$0xf]
      %v292 = vld [vmem:[%s242 + $0x84] sm:$0xf]
      %v293 = vld [vmem:[%s242 + $0x88] sm:$0xf]
      %v294 = vld [vmem:[%s242 + $0x8c] sm:$0xf]
      %v295 = vld [vmem:[%s2] sm:$0xf]
      %v296 = vld [vmem:[%s2 + $0x4] sm:$0x3]
      %v333 = vunpack.c.l.b16 %v259
      %v334 = vunpack.c.l.b16 %v260
      %v335 = vunpack.c.l.b16 %v261
      %v336 = vunpack.c.l.b16 %v262
      %v337 = vunpack.c.l.b16 %v263
      %v338 = vunpack.c.l.b16 %v264
      %v339 = vunpack.c.l.b16 %v265
      %v340 = vunpack.c.l.b16 %v266
      %v341 = vunpack.c.l.b16 %v267
      %v342 = vunpack.c.l.b16 %v268
      %v343 = vunpack.c.l.b16 %v269
      %v344 = vunpack.c.l.b16 %v270
      %v345 = vunpack.c.l.b16 %v271
      %v346 = vunpack.c.l.b16 %v272
      %v347 = vunpack.c.l.b16 %v273
      %v348 = vunpack.c.l.b16 %v274
      %v349 = vunpack.c.l.b16 %v275
      %v350 = vunpack.c.l.b16 %v276
      %v351 = vunpack.c.l.b16 %v277
      %v352 = vunpack.c.l.b16 %v278
      %v353 = vunpack.c.l.b16 %v279
      %v354 = vunpack.c.l.b16 %v280
      %v355 = vunpack.c.l.b16 %v281
      %v356 = vunpack.c.l.b16 %v282
      %v357 = vunpack.c.l.b16 %v283
      %v358 = vunpack.c.l.b16 %v284
      %v359 = vunpack.c.l.b16 %v285
      %v360 = vunpack.c.l.b16 %v286
      %v361 = vunpack.c.l.b16 %v287
      %v362 = vunpack.c.l.b16 %v288
      %v363 = vunpack.c.l.b16 %v289
      %v364 = vunpack.c.l.b16 %v290
      %v365 = vunpack.c.l.b16 %v291
      %v366 = vunpack.c.l.b16 %v292
      %v367 = vunpack.c.l.b16 %v293
      %v368 = vunpack.c.l.b16 %v294
      %v369 = vpack.c.b16 %v334, %v333
      %v370 = vpack.c.b16 %v336, %v335
      %v371 = vpack.c.b16 %v338, %v337
      %v372 = vpack.c.b16 %v340, %v339
      %v373 = vpack.c.b16 %v342, %v341
      %v374 = vpack.c.b16 %v344, %v343
      %v375 = vpack.c.b16 %v346, %v345
      %v376 = vpack.c.b16 %v348, %v347
      %v377 = vpack.c.b16 %v350, %v349
      %v378 = vpack.c.b16 %v352, %v351
      %v379 = vpack.c.b16 %v354, %v353
      %v380 = vpack.c.b16 %v356, %v355
      %v381 = vpack.c.b16 %v358, %v357
      %v382 = vpack.c.b16 %v360, %v359
      %v383 = vpack.c.b16 %v362, %v361
      %v384 = vpack.c.b16 %v364, %v363
      %v385 = vpack.c.b16 %v366, %v365
      %v386 = vpack.c.b16 %v368, %v367
      %v389 = vunpack.c.l.b16 %v295
      %v390 = vunpack.c.l.b16 %v296
      %v391 = vpack.c.b16 %v390, %v389
      %vm392 = vcmask 97280
      %v394 = vsel %vm392, %v369, 0
      %v397 = vsel %vm392, %v370, 0
      %v400 = vsel %vm392, %v371, 0
      %v403 = vsel %vm392, %v372, 0
      %v406 = vsel %vm392, %v373, 0
      %v409 = vsel %vm392, %v374, 0
      %v412 = vsel %vm392, %v375, 0
      %v415 = vsel %vm392, %v376, 0
      %v418 = vsel %vm392, %v377, 0
      %v421 = vsel %vm392, %v378, 0
      %v424 = vsel %vm392, %v379, 0
      %v427 = vsel %vm392, %v380, 0
      %v430 = vsel %vm392, %v381, 0
      %v433 = vsel %vm392, %v382, 0
      %v436 = vsel %vm392, %v383, 0
      %v439 = vsel %vm392, %v384, 0
      %v442 = vsel %vm392, %v385, 0
      %v445 = vsel %vm392, %v386, 0
      %vm447 = vcmask 1045504
      %v449 = vsel %vm447, %v391, 0
      %451 = vmatprep.subr.bf16.mxu0 0
      %452 = vmatpush1.bf16.msra.mxu0 0
      %453 = vmatprep.subr.bf16.mxu0 0
      %454 = vmatpush1.bf16.msra.mxu0 0
      %455 = vmatprep.subr.bf16.mxu0 0
      %456 = vmatpush1.bf16.msra.mxu0 0
      %457 = vmatprep.subr.bf16.mxu0 0
      %458 = vmatpush1.bf16.msra.mxu0 0
      %459 = vmatprep.subr.bf16.mxu0 0
      %460 = vmatpush1.bf16.msra.mxu0 0
      %461 = vmatprep.subr.bf16.mxu0 0
      %462 = vmatpush1.bf16.msra.mxu0 0
      %463 = vmatprep.subr.bf16.mxu0 0
      %464 = vmatpush1.bf16.msra.mxu0 0
      %465 = vmatprep.subr.bf16.mxu0 0
      %466 = vmatpush1.bf16.msra.mxu0 %v449
      %467 = vmatprep.subr.bf16.mxu0 0
      %468 = vmatpush2.bf16.msra.mxu0 0
      %469 = vmatprep.subr.bf16.mxu0 0
      %470 = vmatpush2.bf16.msra.mxu0 0
      %471 = vmatprep.subr.bf16.mxu0 0
      %472 = vmatpush2.bf16.msra.mxu0 0
      %473 = vmatprep.subr.bf16.mxu0 0
      %474 = vmatpush2.bf16.msra.mxu0 0
      %475 = vmatprep.subr.bf16.mxu0 0
      %476 = vmatpush2.bf16.msra.mxu0 0
      %477 = vmatprep.subr.bf16.mxu0 0
      %478 = vmatpush2.bf16.msra.mxu0 0
      %479 = vmatprep.subr.bf16.mxu0 0
      %480 = vmatpush2.bf16.msra.mxu0 0
      %481 = vmatprep.subr.bf16.mxu0 0
      %482 = vmatpush2.bf16.msra.mxu0 0
      %483 = vmatprep.mubr.bf16.mxu0 0
      %484 = vmatmul.mubr.bf16.gmra.mxu0 %v394
      %v485 = vpop.f32.mrf.mxu0
      %v486 = vadd.f32 0.0, %v485
      %v487 = vpop.f32.mrf.mxu0
      %v488 = vpop.f32.mrf.mxu0
      %v489 = vadd.f32 0.0, %v488
      %v490 = vpop.f32.mrf.mxu0
      %491 = vmatprep.mubr.bf16.mxu0 0
      %492 = vmatmul.mubr.bf16.gmra.mxu0 %v397
      %v493 = vpop.f32.mrf.mxu0
      %v494 = vadd.f32 0.0, %v493
      %v495 = vpop.f32.mrf.mxu0
      %v496 = vpop.f32.mrf.mxu0
      %v497 = vadd.f32 0.0, %v496
      %v498 = vpop.f32.mrf.mxu0
      %499 = vmatprep.mubr.bf16.mxu0 0
      %500 = vmatmul.mubr.bf16.gmra.mxu0 %v400
      %v501 = vpop.f32.mrf.mxu0
      %v502 = vadd.f32 0.0, %v501
      %v503 = vpop.f32.mrf.mxu0
      %v504 = vpop.f32.mrf.mxu0
      %v505 = vadd.f32 0.0, %v504
      %v506 = vpop.f32.mrf.mxu0
      %507 = vmatprep.mubr.bf16.mxu0 0
      %508 = vmatmul.mubr.bf16.gmra.mxu0 %v403
      %v509 = vpop.f32.mrf.mxu0
      %v510 = vadd.f32 0.0, %v509
      %v511 = vpop.f32.mrf.mxu0
      %v512 = vpop.f32.mrf.mxu0
      %v513 = vadd.f32 0.0, %v512
      %v514 = vpop.f32.mrf.mxu0
      %515 = vmatprep.mubr.bf16.mxu0 0
      %516 = vmatmul.mubr.bf16.gmra.mxu0 %v406
      %v517 = vpop.f32.mrf.mxu0
      %v518 = vadd.f32 0.0, %v517
      %v519 = vpop.f32.mrf.mxu0
      %v520 = vpop.f32.mrf.mxu0
      %v521 = vadd.f32 0.0, %v520
      %v522 = vpop.f32.mrf.mxu0
      %523 = vmatprep.mubr.bf16.mxu0 0
      %524 = vmatmul.mubr.bf16.gmra.mxu0 %v409
      %v525 = vpop.f32.mrf.mxu0
      %v526 = vadd.f32 0.0, %v525
      %v527 = vpop.f32.mrf.mxu0
      %v528 = vpop.f32.mrf.mxu0
      %v529 = vadd.f32 0.0, %v528
      %v530 = vpop.f32.mrf.mxu0
      %531 = vmatprep.mubr.bf16.mxu0 0
      %532 = vmatmul.mubr.bf16.gmra.mxu0 %v412
      %v533 = vpop.f32.mrf.mxu0
      %v534 = vadd.f32 0.0, %v533
      %v535 = vpop.f32.mrf.mxu0
      %v536 = vpop.f32.mrf.mxu0
      %v537 = vadd.f32 0.0, %v536
      %v538 = vpop.f32.mrf.mxu0
      %539 = vmatprep.mubr.bf16.mxu0 0
      %540 = vmatmul.mubr.bf16.gmra.mxu0 %v415
      %v541 = vpop.f32.mrf.mxu0
      %v542 = vadd.f32 0.0, %v541
      %v543 = vpop.f32.mrf.mxu0
      %v544 = vpop.f32.mrf.mxu0
      %v545 = vadd.f32 0.0, %v544
      %v546 = vpop.f32.mrf.mxu0
      %547 = vmatprep.mubr.bf16.mxu0 0
      %548 = vmatmul.mubr.bf16.gmra.mxu0 %v418
      %v549 = vpop.f32.mrf.mxu0
      %v550 = vadd.f32 0.0, %v549
      %v551 = vpop.f32.mrf.mxu0
      %v552 = vpop.f32.mrf.mxu0
      %v553 = vadd.f32 0.0, %v552
      %v554 = vpop.f32.mrf.mxu0
      %555 = vmatprep.mubr.bf16.mxu0 0
      %556 = vmatmul.mubr.bf16.gmra.mxu0 %v421
      %v557 = vpop.f32.mrf.mxu0
      %v558 = vadd.f32 0.0, %v557
      %v559 = vpop.f32.mrf.mxu0
      %v560 = vpop.f32.mrf.mxu0
      %v561 = vadd.f32 0.0, %v560
      %v562 = vpop.f32.mrf.mxu0
      %563 = vmatprep.mubr.bf16.mxu0 0
      %564 = vmatmul.mubr.bf16.gmra.mxu0 %v424
      %v565 = vpop.f32.mrf.mxu0
      %v566 = vadd.f32 0.0, %v565
      %v567 = vpop.f32.mrf.mxu0
      %v568 = vpop.f32.mrf.mxu0
      %v569 = vadd.f32 0.0, %v568
      %v570 = vpop.f32.mrf.mxu0
      %571 = vmatprep.mubr.bf16.mxu0 0
      %572 = vmatmul.mubr.bf16.gmra.mxu0 %v427
      %v573 = vpop.f32.mrf.mxu0
      %v574 = vadd.f32 0.0, %v573
      %v575 = vpop.f32.mrf.mxu0
      %v576 = vpop.f32.mrf.mxu0
      %v577 = vadd.f32 0.0, %v576
      %v578 = vpop.f32.mrf.mxu0
      %579 = vmatprep.mubr.bf16.mxu0 0
      %580 = vmatmul.mubr.bf16.gmra.mxu0 %v430
      %v581 = vpop.f32.mrf.mxu0
      %v582 = vadd.f32 0.0, %v581
      %v583 = vpop.f32.mrf.mxu0
      %v584 = vpop.f32.mrf.mxu0
      %v585 = vadd.f32 0.0, %v584
      %v586 = vpop.f32.mrf.mxu0
      %587 = vmatprep.mubr.bf16.mxu0 0
      %588 = vmatmul.mubr.bf16.gmra.mxu0 %v433
      %v589 = vpop.f32.mrf.mxu0
      %v590 = vadd.f32 0.0, %v589
      %v591 = vpop.f32.mrf.mxu0
      %v592 = vpop.f32.mrf.mxu0
      %v593 = vadd.f32 0.0, %v592
      %v594 = vpop.f32.mrf.mxu0
      %595 = vmatprep.mubr.bf16.mxu0 0
      %596 = vmatmul.mubr.bf16.gmra.mxu0 %v436
      %v597 = vpop.f32.mrf.mxu0
      %v598 = vadd.f32 0.0, %v597
      %v599 = vpop.f32.mrf.mxu0
      %v600 = vpop.f32.mrf.mxu0
      %v601 = vadd.f32 0.0, %v600
      %v602 = vpop.f32.mrf.mxu0
      %603 = vmatprep.mubr.bf16.mxu0 0
      %604 = vmatmul.mubr.bf16.gmra.mxu0 %v439
      %v605 = vpop.f32.mrf.mxu0
      %v606 = vadd.f32 0.0, %v605
      %v607 = vpop.f32.mrf.mxu0
      %v608 = vpop.f32.mrf.mxu0
      %v609 = vadd.f32 0.0, %v608
      %v610 = vpop.f32.mrf.mxu0
      %611 = vmatprep.mubr.bf16.mxu0 0
      %612 = vmatmul.mubr.bf16.gmra.mxu0 %v442
      %v613 = vpop.f32.mrf.mxu0
      %v614 = vpop.f32.mrf.mxu0
      %v615 = vpop.f32.mrf.mxu0
      %v616 = vpop.f32.mrf.mxu0
      %617 = vmatprep.mubr.bf16.mxu0 0
      %618 = vmatmul.mubr.bf16.gmra.mxu0 %v445
      %v619 = vpop.f32.mrf.mxu0
      %v620 = vpop.f32.mrf.mxu0
      %v621 = vpop.f32.mrf.mxu0
      %v622 = vpop.f32.mrf.mxu0
      %623 = vdwg.mxu0
      %s624 = scalar_lea.vmem %s2, 8
      %v625 = vld [vmem:[%s624] sm:$0xf]
      %v626 = vld [vmem:[%s624 + $0x4] sm:$0x3]
      %v629 = vunpack.c.l.b16 %v625
      %v630 = vunpack.c.l.b16 %v626
      %v631 = vpack.c.b16 %v630, %v629
      %v633 = vsel %vm447, %v631, 0
      %635 = vmatprep.subr.bf16.mxu0 0
      %636 = vmatpush1.bf16.msra.mxu0 0
      %637 = vmatprep.subr.bf16.mxu0 0
      %638 = vmatpush1.bf16.msra.mxu0 0
      %639 = vmatprep.subr.bf16.mxu0 0
      %640 = vmatpush1.bf16.msra.mxu0 0
      %641 = vmatprep.subr.bf16.mxu0 0
      %642 = vmatpush1.bf16.msra.mxu0 0
      %643 = vmatprep.subr.bf16.mxu0 0
      %644 = vmatpush1.bf16.msra.mxu0 0
      %645 = vmatprep.subr.bf16.mxu0 0
      %646 = vmatpush1.bf16.msra.mxu0 0
      %647 = vmatprep.subr.bf16.mxu0 0
      %648 = vmatpush1.bf16.msra.mxu0 0
      %649 = vmatprep.subr.bf16.mxu0 0
      %650 = vmatpush1.bf16.msra.mxu0 %v633
      %651 = vmatprep.subr.bf16.mxu0 0
      %652 = vmatpush2.bf16.msra.mxu0 0
      %653 = vmatprep.subr.bf16.mxu0 0
      %654 = vmatpush2.bf16.msra.mxu0 0
      %655 = vmatprep.subr.bf16.mxu0 0
      %656 = vmatpush2.bf16.msra.mxu0 0
      %657 = vmatprep.subr.bf16.mxu0 0
      %658 = vmatpush2.bf16.msra.mxu0 0
      %659 = vmatprep.subr.bf16.mxu0 0
      %660 = vmatpush2.bf16.msra.mxu0 0
      %661 = vmatprep.subr.bf16.mxu0 0
      %662 = vmatpush2.bf16.msra.mxu0 0
      %663 = vmatprep.subr.bf16.mxu0 0
      %664 = vmatpush2.bf16.msra.mxu0 0
      %665 = vmatprep.subr.bf16.mxu0 0
      %666 = vmatpush2.bf16.msra.mxu0 0
      %667 = vmatprep.mubr.bf16.mxu0 0
      %668 = vmatmul.mubr.bf16.gmra.mxu0 %v394
      %v669 = vpop.f32.mrf.mxu0
      %v670 = vpop.f32.mrf.mxu0
      %v671 = vpop.f32.mrf.mxu0
      %v672 = vpop.f32.mrf.mxu0
      %673 = vmatprep.mubr.bf16.mxu0 0
      %674 = vmatmul.mubr.bf16.gmra.mxu0 %v397
      %v675 = vpop.f32.mrf.mxu0
      %v676 = vadd.f32 0.0, %v675
      %v677 = vpop.f32.mrf.mxu0
      %v678 = vpop.f32.mrf.mxu0
      %v679 = vadd.f32 0.0, %v678
      %v680 = vpop.f32.mrf.mxu0
      %681 = vmatprep.mubr.bf16.mxu0 0
      %682 = vmatmul.mubr.bf16.gmra.mxu0 %v400
      %v683 = vpop.f32.mrf.mxu0
      %v684 = vadd.f32 0.0, %v683
      %v685 = vpop.f32.mrf.mxu0
      %v686 = vpop.f32.mrf.mxu0
      %v687 = vadd.f32 0.0, %v686
      %v688 = vpop.f32.mrf.mxu0
      %689 = vmatprep.mubr.bf16.mxu0 0
      %690 = vmatmul.mubr.bf16.gmra.mxu0 %v403
      %v691 = vpop.f32.mrf.mxu0
      %v692 = vadd.f32 0.0, %v691
      %v693 = vpop.f32.mrf.mxu0
      %v694 = vpop.f32.mrf.mxu0
      %v695 = vadd.f32 0.0, %v694
      %v696 = vpop.f32.mrf.mxu0
      %697 = vmatprep.mubr.bf16.mxu0 0
      %698 = vmatmul.mubr.bf16.gmra.mxu0 %v406
      %v699 = vpop.f32.mrf.mxu0
      %v700 = vadd.f32 0.0, %v699
      %v701 = vpop.f32.mrf.mxu0
      %v702 = vpop.f32.mrf.mxu0
      %v703 = vadd.f32 0.0, %v702
      %v704 = vpop.f32.mrf.mxu0
      %705 = vmatprep.mubr.bf16.mxu0 0
      %706 = vmatmul.mubr.bf16.gmra.mxu0 %v409
      %v707 = vpop.f32.mrf.mxu0
      %v708 = vadd.f32 0.0, %v707
      %v709 = vpop.f32.mrf.mxu0
      %v710 = vpop.f32.mrf.mxu0
      %v711 = vadd.f32 0.0, %v710
      %v712 = vpop.f32.mrf.mxu0
      %713 = vmatprep.mubr.bf16.mxu0 0
      %714 = vmatmul.mubr.bf16.gmra.mxu0 %v412
      %v715 = vpop.f32.mrf.mxu0
      %v716 = vadd.f32 0.0, %v715
      %v717 = vpop.f32.mrf.mxu0
      %v718 = vpop.f32.mrf.mxu0
      %v719 = vadd.f32 0.0, %v718
      %v720 = vpop.f32.mrf.mxu0
      %721 = vmatprep.mubr.bf16.mxu0 0
      %722 = vmatmul.mubr.bf16.gmra.mxu0 %v415
      %v723 = vpop.f32.mrf.mxu0
      %v724 = vadd.f32 0.0, %v723
      %v725 = vpop.f32.mrf.mxu0
      %v726 = vpop.f32.mrf.mxu0
      %v727 = vadd.f32 0.0, %v726
      %v728 = vpop.f32.mrf.mxu0
      %729 = vmatprep.mubr.bf16.mxu0 0
      %730 = vmatmul.mubr.bf16.gmra.mxu0 %v418
      %v731 = vpop.f32.mrf.mxu0
      %v732 = vadd.f32 0.0, %v731
      %v733 = vpop.f32.mrf.mxu0
      %v734 = vpop.f32.mrf.mxu0
      %v735 = vadd.f32 0.0, %v734
      %v736 = vpop.f32.mrf.mxu0
      %737 = vmatprep.mubr.bf16.mxu0 0
      %738 = vmatmul.mubr.bf16.gmra.mxu0 %v421
      %v739 = vpop.f32.mrf.mxu0
      %v740 = vadd.f32 0.0, %v739
      %v741 = vpop.f32.mrf.mxu0
      %v742 = vpop.f32.mrf.mxu0
      %v743 = vadd.f32 0.0, %v742
      %v744 = vpop.f32.mrf.mxu0
      %745 = vmatprep.mubr.bf16.mxu0 0
      %746 = vmatmul.mubr.bf16.gmra.mxu0 %v424
      %v747 = vpop.f32.mrf.mxu0
      %v748 = vadd.f32 0.0, %v747
      %v749 = vpop.f32.mrf.mxu0
      %v750 = vpop.f32.mrf.mxu0
      %v751 = vadd.f32 0.0, %v750
      %v752 = vpop.f32.mrf.mxu0
      %753 = vmatprep.mubr.bf16.mxu0 0
      %754 = vmatmul.mubr.bf16.gmra.mxu0 %v427
      %v755 = vpop.f32.mrf.mxu0
      %v756 = vadd.f32 0.0, %v755
      %v757 = vpop.f32.mrf.mxu0
      %v758 = vpop.f32.mrf.mxu0
      %v759 = vadd.f32 0.0, %v758
      %v760 = vpop.f32.mrf.mxu0
      %761 = vmatprep.mubr.bf16.mxu0 0
      %762 = vmatmul.mubr.bf16.gmra.mxu0 %v430
      %v763 = vpop.f32.mrf.mxu0
      %v764 = vadd.f32 0.0, %v763
      %v765 = vpop.f32.mrf.mxu0
      %v766 = vpop.f32.mrf.mxu0
      %v767 = vadd.f32 0.0, %v766
      %v768 = vpop.f32.mrf.mxu0
      %769 = vmatprep.mubr.bf16.mxu0 0
      %770 = vmatmul.mubr.bf16.gmra.mxu0 %v433
      %v771 = vpop.f32.mrf.mxu0
      %v772 = vadd.f32 0.0, %v771
      %v773 = vpop.f32.mrf.mxu0
      %v774 = vpop.f32.mrf.mxu0
      %v775 = vadd.f32 0.0, %v774
      %v776 = vpop.f32.mrf.mxu0
      %777 = vmatprep.mubr.bf16.mxu0 0
      %778 = vmatmul.mubr.bf16.gmra.mxu0 %v436
      %v779 = vpop.f32.mrf.mxu0
      %v780 = vadd.f32 0.0, %v779
      %v781 = vpop.f32.mrf.mxu0
      %v782 = vpop.f32.mrf.mxu0
      %v783 = vadd.f32 0.0, %v782
      %v784 = vpop.f32.mrf.mxu0
      %785 = vmatprep.mubr.bf16.mxu0 0
      %786 = vmatmul.mubr.bf16.gmra.mxu0 %v439
      %v787 = vpop.f32.mrf.mxu0
      %v788 = vadd.f32 0.0, %v787
      %v789 = vpop.f32.mrf.mxu0
      %v790 = vpop.f32.mrf.mxu0
      %v791 = vadd.f32 0.0, %v790
      %v792 = vpop.f32.mrf.mxu0
      %793 = vmatprep.mubr.bf16.mxu0 0
      %794 = vmatmul.mubr.bf16.gmra.mxu0 %v442
      %v795 = vpop.f32.mrf.mxu0
      %v796 = vadd.f32 0.0, %v795
      %v797 = vpop.f32.mrf.mxu0
      %v798 = vpop.f32.mrf.mxu0
      %v799 = vadd.f32 0.0, %v798
      %v800 = vpop.f32.mrf.mxu0
      %801 = vmatprep.mubr.bf16.mxu0 0
      %802 = vmatmul.mubr.bf16.gmra.mxu0 %v445
      %v803 = vpop.f32.mrf.mxu0
      %v804 = vpop.f32.mrf.mxu0
      %v805 = vpop.f32.mrf.mxu0
      %v806 = vpop.f32.mrf.mxu0
      %807 = vdwg.mxu0
      %v808 = vadd.f32 %v486, %v676
      %v809 = vadd.f32 %v489, %v679
      %v810 = vadd.f32 %v494, %v684
      %v811 = vadd.f32 %v497, %v687
      %v812 = vadd.f32 %v502, %v692
      %v813 = vadd.f32 %v505, %v695
      %v814 = vadd.f32 %v510, %v700
      %v815 = vadd.f32 %v513, %v703
      %v816 = vadd.f32 %v518, %v708
      %v817 = vadd.f32 %v521, %v711
      %v818 = vadd.f32 %v526, %v716
      %v819 = vadd.f32 %v529, %v719
      %v820 = vadd.f32 %v534, %v724
      %v821 = vadd.f32 %v537, %v727
      %v822 = vadd.f32 %v542, %v732
      %v823 = vadd.f32 %v545, %v735
      %v824 = vadd.f32 %v550, %v740
      %v825 = vadd.f32 %v553, %v743
      %v826 = vadd.f32 %v558, %v748
      %v827 = vadd.f32 %v561, %v751
      %v828 = vadd.f32 %v566, %v756
      %v829 = vadd.f32 %v569, %v759
      %v830 = vadd.f32 %v574, %v764
      %v831 = vadd.f32 %v577, %v767
      %v832 = vadd.f32 %v582, %v772
      %v833 = vadd.f32 %v585, %v775
      %v834 = vadd.f32 %v590, %v780
      %v835 = vadd.f32 %v593, %v783
      %v836 = vadd.f32 %v598, %v788
      %v837 = vadd.f32 %v601, %v791
      %v838 = vadd.f32 %v606, %v796
      %v839 = vadd.f32 %v609, %v799
      %s840 = scalar_lea.vmem %s2, 16
      %v841 = vld [vmem:[%s840] sm:$0xf]
      %v842 = vld [vmem:[%s840 + $0x4] sm:$0x3]
      %v845 = vunpack.c.l.b16 %v841
      %v846 = vunpack.c.l.b16 %v842
      %v847 = vpack.c.b16 %v846, %v845
      %v849 = vsel %vm447, %v847, 0
      %851 = vmatprep.subr.bf16.mxu0 0
      %852 = vmatpush1.bf16.msra.mxu0 0
      %853 = vmatprep.subr.bf16.mxu0 0
      %854 = vmatpush1.bf16.msra.mxu0 0
      %855 = vmatprep.subr.bf16.mxu0 0
      %856 = vmatpush1.bf16.msra.mxu0 0
      %857 = vmatprep.subr.bf16.mxu0 0
      %858 = vmatpush1.bf16.msra.mxu0 0
      %859 = vmatprep.subr.bf16.mxu0 0
      %860 = vmatpush1.bf16.msra.mxu0 0
      %861 = vmatprep.subr.bf16.mxu0 0
      %862 = vmatpush1.bf16.msra.mxu0 0
      %863 = vmatprep.subr.bf16.mxu0 0
      %864 = vmatpush1.bf16.msra.mxu0 0
      %865 = vmatprep.subr.bf16.mxu0 0
      %866 = vmatpush1.bf16.msra.mxu0 %v849
      %867 = vmatprep.subr.bf16.mxu0 0
      %868 = vmatpush2.bf16.msra.mxu0 0
      %869 = vmatprep.subr.bf16.mxu0 0
      %870 = vmatpush2.bf16.msra.mxu0 0
      %871 = vmatprep.subr.bf16.mxu0 0
      %872 = vmatpush2.bf16.msra.mxu0 0
      %873 = vmatprep.subr.bf16.mxu0 0
      %874 = vmatpush2.bf16.msra.mxu0 0
      %875 = vmatprep.subr.bf16.mxu0 0
      %876 = vmatpush2.bf16.msra.mxu0 0
      %877 = vmatprep.subr.bf16.mxu0 0
      %878 = vmatpush2.bf16.msra.mxu0 0
      %879 = vmatprep.subr.bf16.mxu0 0
      %880 = vmatpush2.bf16.msra.mxu0 0
      %881 = vmatprep.subr.bf16.mxu0 0
      %882 = vmatpush2.bf16.msra.mxu0 0
      %883 = vmatprep.mubr.bf16.mxu0 0
      %884 = vmatmul.mubr.bf16.gmra.mxu0 %v394
      %v885 = vpop.f32.mrf.mxu0
      %v886 = vpop.f32.mrf.mxu0
      %v887 = vpop.f32.mrf.mxu0
      %v888 = vpop.f32.mrf.mxu0
      %889 = vmatprep.mubr.bf16.mxu0 0
      %890 = vmatmul.mubr.bf16.gmra.mxu0 %v397
      %v891 = vpop.f32.mrf.mxu0
      %v892 = vpop.f32.mrf.mxu0
      %v893 = vpop.f32.mrf.mxu0
      %v894 = vpop.f32.mrf.mxu0
      %895 = vmatprep.mubr.bf16.mxu0 0
      %896 = vmatmul.mubr.bf16.gmra.mxu0 %v400
      %v897 = vpop.f32.mrf.mxu0
      %v898 = vadd.f32 0.0, %v897
      %v899 = vpop.f32.mrf.mxu0
      %v900 = vpop.f32.mrf.mxu0
      %v901 = vadd.f32 0.0, %v900
      %v902 = vpop.f32.mrf.mxu0
      %903 = vmatprep.mubr.bf16.mxu0 0
      %904 = vmatmul.mubr.bf16.gmra.mxu0 %v403
      %v905 = vpop.f32.mrf.mxu0
      %v906 = vadd.f32 0.0, %v905
      %v907 = vpop.f32.mrf.mxu0
      %v908 = vpop.f32.mrf.mxu0
      %v909 = vadd.f32 0.0, %v908
      %v910 = vpop.f32.mrf.mxu0
      %911 = vmatprep.mubr.bf16.mxu0 0
      %912 = vmatmul.mubr.bf16.gmra.mxu0 %v406
      %v913 = vpop.f32.mrf.mxu0
      %v914 = vadd.f32 0.0, %v913
      %v915 = vpop.f32.mrf.mxu0
      %v916 = vpop.f32.mrf.mxu0
      %v917 = vadd.f32 0.0, %v916
      %v918 = vpop.f32.mrf.mxu0
      %919 = vmatprep.mubr.bf16.mxu0 0
      %920 = vmatmul.mubr.bf16.gmra.mxu0 %v409
      %v921 = vpop.f32.mrf.mxu0
      %v922 = vadd.f32 0.0, %v921
      %v923 = vpop.f32.mrf.mxu0
      %v924 = vpop.f32.mrf.mxu0
      %v925 = vadd.f32 0.0, %v924
      %v926 = vpop.f32.mrf.mxu0
      %927 = vmatprep.mubr.bf16.mxu0 0
      %928 = vmatmul.mubr.bf16.gmra.mxu0 %v412
      %v929 = vpop.f32.mrf.mxu0
      %v930 = vadd.f32 0.0, %v929
      %v931 = vpop.f32.mrf.mxu0
      %v932 = vpop.f32.mrf.mxu0
      %v933 = vadd.f32 0.0, %v932
      %v934 = vpop.f32.mrf.mxu0
      %935 = vmatprep.mubr.bf16.mxu0 0
      %936 = vmatmul.mubr.bf16.gmra.mxu0 %v415
      %v937 = vpop.f32.mrf.mxu0
      %v938 = vadd.f32 0.0, %v937
      %v939 = vpop.f32.mrf.mxu0
      %v940 = vpop.f32.mrf.mxu0
      %v941 = vadd.f32 0.0, %v940
      %v942 = vpop.f32.mrf.mxu0
      %943 = vmatprep.mubr.bf16.mxu0 0
      %944 = vmatmul.mubr.bf16.gmra.mxu0 %v418
      %v945 = vpop.f32.mrf.mxu0
      %v946 = vadd.f32 0.0, %v945
      %v947 = vpop.f32.mrf.mxu0
      %v948 = vpop.f32.mrf.mxu0
      %v949 = vadd.f32 0.0, %v948
      %v950 = vpop.f32.mrf.mxu0
      %951 = vmatprep.mubr.bf16.mxu0 0
      %952 = vmatmul.mubr.bf16.gmra.mxu0 %v421
      %v953 = vpop.f32.mrf.mxu0
      %v954 = vadd.f32 0.0, %v953
      %v955 = vpop.f32.mrf.mxu0
      %v956 = vpop.f32.mrf.mxu0
      %v957 = vadd.f32 0.0, %v956
      %v958 = vpop.f32.mrf.mxu0
      %959 = vmatprep.mubr.bf16.mxu0 0
      %960 = vmatmul.mubr.bf16.gmra.mxu0 %v424
      %v961 = vpop.f32.mrf.mxu0
      %v962 = vadd.f32 0.0, %v961
      %v963 = vpop.f32.mrf.mxu0
      %v964 = vpop.f32.mrf.mxu0
      %v965 = vadd.f32 0.0, %v964
      %v966 = vpop.f32.mrf.mxu0
      %967 = vmatprep.mubr.bf16.mxu0 0
      %968 = vmatmul.mubr.bf16.gmra.mxu0 %v427
      %v969 = vpop.f32.mrf.mxu0
      %v970 = vadd.f32 0.0, %v969
      %v971 = vpop.f32.mrf.mxu0
      %v972 = vpop.f32.mrf.mxu0
      %v973 = vadd.f32 0.0, %v972
      %v974 = vpop.f32.mrf.mxu0
      %975 = vmatprep.mubr.bf16.mxu0 0
      %976 = vmatmul.mubr.bf16.gmra.mxu0 %v430
      %v977 = vpop.f32.mrf.mxu0
      %v978 = vadd.f32 0.0, %v977
      %v979 = vpop.f32.mrf.mxu0
      %v980 = vpop.f32.mrf.mxu0
      %v981 = vadd.f32 0.0, %v980
      %v982 = vpop.f32.mrf.mxu0
      %983 = vmatprep.mubr.bf16.mxu0 0
      %984 = vmatmul.mubr.bf16.gmra.mxu0 %v433
      %v985 = vpop.f32.mrf.mxu0
      %v986 = vadd.f32 0.0, %v985
      %v987 = vpop.f32.mrf.mxu0
      %v988 = vpop.f32.mrf.mxu0
      %v989 = vadd.f32 0.0, %v988
      %v990 = vpop.f32.mrf.mxu0
      %991 = vmatprep.mubr.bf16.mxu0 0
      %992 = vmatmul.mubr.bf16.gmra.mxu0 %v436
      %v993 = vpop.f32.mrf.mxu0
      %v994 = vadd.f32 0.0, %v993
      %v995 = vpop.f32.mrf.mxu0
      %v996 = vpop.f32.mrf.mxu0
      %v997 = vadd.f32 0.0, %v996
      %v998 = vpop.f32.mrf.mxu0
      %999 = vmatprep.mubr.bf16.mxu0 0
      %1000 = vmatmul.mubr.bf16.gmra.mxu0 %v439
      %v1001 = vpop.f32.mrf.mxu0
      %v1002 = vadd.f32 0.0, %v1001
      %v1003 = vpop.f32.mrf.mxu0
      %v1004 = vpop.f32.mrf.mxu0
      %v1005 = vadd.f32 0.0, %v1004
      %v1006 = vpop.f32.mrf.mxu0
      %1007 = vmatprep.mubr.bf16.mxu0 0
      %1008 = vmatmul.mubr.bf16.gmra.mxu0 %v442
      %v1009 = vpop.f32.mrf.mxu0
      %v1010 = vadd.f32 0.0, %v1009
      %v1011 = vpop.f32.mrf.mxu0
      %v1012 = vpop.f32.mrf.mxu0
      %v1013 = vadd.f32 0.0, %v1012
      %v1014 = vpop.f32.mrf.mxu0
      %1015 = vmatprep.mubr.bf16.mxu0 0
      %1016 = vmatmul.mubr.bf16.gmra.mxu0 %v445
      %v1017 = vpop.f32.mrf.mxu0
      %v1018 = vadd.f32 0.0, %v1017
      %v1019 = vpop.f32.mrf.mxu0
      %v1020 = vpop.f32.mrf.mxu0
      %v1021 = vadd.f32 0.0, %v1020
      %v1022 = vpop.f32.mrf.mxu0
      %1023 = vdwg.mxu0
      %v1024 = vadd.f32 %v808, %v898
      %v1025 = vadd.f32 %v809, %v901
      %v1026 = vadd.f32 %v810, %v906
      %v1027 = vadd.f32 %v811, %v909
      %v1028 = vadd.f32 %v812, %v914
      %v1029 = vadd.f32 %v813, %v917
      %v1030 = vadd.f32 %v814, %v922
      %v1031 = vadd.f32 %v815, %v925
      %v1032 = vadd.f32 %v816, %v930
      %v1033 = vadd.f32 %v817, %v933
      %v1034 = vadd.f32 %v818, %v938
      %v1035 = vadd.f32 %v819, %v941
      %v1036 = vadd.f32 %v820, %v946
      %v1037 = vadd.f32 %v821, %v949
      %v1038 = vadd.f32 %v822, %v954
      %v1039 = vadd.f32 %v823, %v957
      %v1040 = vadd.f32 %v824, %v962
      %v1041 = vadd.f32 %v825, %v965
      %v1042 = vadd.f32 %v826, %v970
      %v1043 = vadd.f32 %v827, %v973
      %v1044 = vadd.f32 %v828, %v978
      %v1045 = vadd.f32 %v829, %v981
      %v1046 = vadd.f32 %v830, %v986
      %v1047 = vadd.f32 %v831, %v989
      %v1048 = vadd.f32 %v832, %v994
      %v1049 = vadd.f32 %v833, %v997
      %v1050 = vadd.f32 %v834, %v1002
      %v1051 = vadd.f32 %v835, %v1005
      %v1052 = vadd.f32 %v836, %v1010
      %v1053 = vadd.f32 %v837, %v1013
      %v1054 = vadd.f32 %v838, %v1018
      %v1055 = vadd.f32 %v839, %v1021
      %1056 = vst [vmem:[%s252] sm:$0xff] %v1024
      %1057 = vst [vmem:[%s252 + $0x8] sm:$0xff] %v1025
      %1058 = vst [vmem:[%s252 + $0x10] sm:$0xff] %v1026
      %1059 = vst [vmem:[%s252 + $0x18] sm:$0xff] %v1027
      %1060 = vst [vmem:[%s252 + $0x20] sm:$0xff] %v1028
      %1061 = vst [vmem:[%s252 + $0x28] sm:$0xff] %v1029
      %1062 = vst [vmem:[%s252 + $0x30] sm:$0xff] %v1030
      %1063 = vst [vmem:[%s252 + $0x38] sm:$0xff] %v1031
      %1064 = vst [vmem:[%s252 + $0x40] sm:$0xff] %v1032
      %1065 = vst [vmem:[%s252 + $0x48] sm:$0xff] %v1033
      %1066 = vst [vmem:[%s252 + $0x50] sm:$0xff] %v1034
      %1067 = vst [vmem:[%s252 + $0x58] sm:$0xff] %v1035
      %1068 = vst [vmem:[%s252 + $0x60] sm:$0xff] %v1036
      %1069 = vst [vmem:[%s252 + $0x68] sm:$0xff] %v1037
      %1070 = vst [vmem:[%s252 + $0x70] sm:$0xff] %v1038
      %1071 = vst [vmem:[%s252 + $0x78] sm:$0xff] %v1039
      %1072 = vst [vmem:[%s252 + $0x80] sm:$0xff] %v1040
      %1073 = vst [vmem:[%s252 + $0x88] sm:$0xff] %v1041
      %1074 = vst [vmem:[%s252 + $0x90] sm:$0xff] %v1042
      %1075 = vst [vmem:[%s252 + $0x98] sm:$0xff] %v1043
      %1076 = vst [vmem:[%s252 + $0xa0] sm:$0xff] %v1044
      %1077 = vst [vmem:[%s252 + $0xa8] sm:$0xff] %v1045
      %1078 = vst [vmem:[%s252 + $0xb0] sm:$0xff] %v1046
      %1079 = vst [vmem:[%s252 + $0xb8] sm:$0xff] %v1047
      %1080 = vst [vmem:[%s252 + $0xc0] sm:$0xff] %v1048
      %1081 = vst [vmem:[%s252 + $0xc8] sm:$0xff] %v1049
      %1082 = vst [vmem:[%s252 + $0xd0] sm:$0xff] %v1050
      %1083 = vst [vmem:[%s252 + $0xd8] sm:$0xff] %v1051
      %1084 = vst [vmem:[%s252 + $0xe0] sm:$0xff] %v1052
      %1085 = vst [vmem:[%s252 + $0xe8] sm:$0xff] %v1053
      %1086 = vst [vmem:[%s252 + $0xf0] sm:$0xff] %v1054
      %1087 = vst [vmem:[%s252 + $0xf8] sm:$0xff] %v1055
      %v1088 = vld [vmem:[%s247] sm:$0xf]
      %v1089 = vld [vmem:[%s247 + $0x4] sm:$0xf]
      %v1090 = vld [vmem:[%s247 + $0x8] sm:$0xf]
      %v1091 = vld [vmem:[%s247 + $0xc] sm:$0xf]
      %v1092 = vld [vmem:[%s247 + $0x10] sm:$0xf]
      %v1093 = vld [vmem:[%s247 + $0x14] sm:$0xf]
      %v1094 = vld [vmem:[%s247 + $0x18] sm:$0xf]
      %v1095 = vld [vmem:[%s247 + $0x1c] sm:$0xf]
      %v1096 = vld [vmem:[%s247 + $0x20] sm:$0xf]
      %v1097 = vld [vmem:[%s247 + $0x24] sm:$0xf]
      %v1098 = vld [vmem:[%s3] sm:$0xf]
      %v1099 = vld [vmem:[%s3 + $0x4] sm:$0x3]
      %v1110 = vunpack.c.l.b16 %v1088
      %v1111 = vunpack.c.l.b16 %v1089
      %v1112 = vunpack.c.l.b16 %v1090
      %v1113 = vunpack.c.l.b16 %v1091
      %v1114 = vunpack.c.l.b16 %v1092
      %v1115 = vunpack.c.l.b16 %v1093
      %v1116 = vunpack.c.l.b16 %v1094
      %v1117 = vunpack.c.l.b16 %v1095
      %v1118 = vunpack.c.l.b16 %v1096
      %v1119 = vunpack.c.l.b16 %v1097
      %v1120 = vpack.c.b16 %v1111, %v1110
      %v1121 = vpack.c.b16 %v1113, %v1112
      %v1122 = vpack.c.b16 %v1115, %v1114
      %v1123 = vpack.c.b16 %v1117, %v1116
      %v1124 = vpack.c.b16 %v1119, %v1118
      %v1127 = vunpack.c.l.b16 %v1098
      %v1128 = vunpack.c.l.b16 %v1099
      %v1129 = vpack.c.b16 %v1128, %v1127
      %v1131 = vsel %vm392, %v1120, 0
      %v1134 = vsel %vm392, %v1121, 0
      %v1137 = vsel %vm392, %v1122, 0
      %v1140 = vsel %vm392, %v1123, 0
      %v1143 = vsel %vm392, %v1124, 0
      %v1146 = vsel %vm447, %v1129, 0
      %1148 = vmatprep.subr.bf16.mxu0 0
      %1149 = vmatpush1.bf16.msra.mxu0 0
      %1150 = vmatprep.subr.bf16.mxu0 0
      %1151 = vmatpush1.bf16.msra.mxu0 0
      %1152 = vmatprep.subr.bf16.mxu0 0
      %1153 = vmatpush1.bf16.msra.mxu0 0
      %1154 = vmatprep.subr.bf16.mxu0 0
      %1155 = vmatpush1.bf16.msra.mxu0 0
      %1156 = vmatprep.subr.bf16.mxu0 0
      %1157 = vmatpush1.bf16.msra.mxu0 0
      %1158 = vmatprep.subr.bf16.mxu0 0
      %1159 = vmatpush1.bf16.msra.mxu0 0
      %1160 = vmatprep.subr.bf16.mxu0 0
      %1161 = vmatpush1.bf16.msra.mxu0 0
      %1162 = vmatprep.subr.bf16.mxu0 0
      %1163 = vmatpush1.bf16.msra.mxu0 %v1146
      %1164 = vmatprep.subr.bf16.mxu0 0
      %1165 = vmatpush2.bf16.msra.mxu0 0
      %1166 = vmatprep.subr.bf16.mxu0 0
      %1167 = vmatpush2.bf16.msra.mxu0 0
      %1168 = vmatprep.subr.bf16.mxu0 0
      %1169 = vmatpush2.bf16.msra.mxu0 0
      %1170 = vmatprep.subr.bf16.mxu0 0
      %1171 = vmatpush2.bf16.msra.mxu0 0
      %1172 = vmatprep.subr.bf16.mxu0 0
      %1173 = vmatpush2.bf16.msra.mxu0 0
      %1174 = vmatprep.subr.bf16.mxu0 0
      %1175 = vmatpush2.bf16.msra.mxu0 0
      %1176 = vmatprep.subr.bf16.mxu0 0
      %1177 = vmatpush2.bf16.msra.mxu0 0
      %1178 = vmatprep.subr.bf16.mxu0 0
      %1179 = vmatpush2.bf16.msra.mxu0 0
      %1180 = vmatprep.mubr.bf16.mxu0 0
      %1181 = vmatmul.mubr.bf16.gmra.mxu0 %v1131
      %v1182 = vpop.f32.mrf.mxu0
      %v1183 = vadd.f32 0.0, %v1182
      %v1184 = vpop.f32.mrf.mxu0
      %v1185 = vpop.f32.mrf.mxu0
      %v1186 = vadd.f32 0.0, %v1185
      %v1187 = vpop.f32.mrf.mxu0
      %1188 = vmatprep.mubr.bf16.mxu0 0
      %1189 = vmatmul.mubr.bf16.gmra.mxu0 %v1134
      %v1190 = vpop.f32.mrf.mxu0
      %v1191 = vadd.f32 0.0, %v1190
      %v1192 = vpop.f32.mrf.mxu0
      %v1193 = vpop.f32.mrf.mxu0
      %v1194 = vadd.f32 0.0, %v1193
      %v1195 = vpop.f32.mrf.mxu0
      %1196 = vmatprep.mubr.bf16.mxu0 0
      %1197 = vmatmul.mubr.bf16.gmra.mxu0 %v1137
      %v1198 = vpop.f32.mrf.mxu0
      %v1199 = vadd.f32 0.0, %v1198
      %v1200 = vpop.f32.mrf.mxu0
      %v1201 = vpop.f32.mrf.mxu0
      %v1202 = vadd.f32 0.0, %v1201
      %v1203 = vpop.f32.mrf.mxu0
      %1204 = vmatprep.mubr.bf16.mxu0 0
      %1205 = vmatmul.mubr.bf16.gmra.mxu0 %v1140
      %v1206 = vpop.f32.mrf.mxu0
      %v1207 = vadd.f32 0.0, %v1206
      %v1208 = vpop.f32.mrf.mxu0
      %v1209 = vpop.f32.mrf.mxu0
      %v1210 = vadd.f32 0.0, %v1209
      %v1211 = vpop.f32.mrf.mxu0
      %1212 = vmatprep.mubr.bf16.mxu0 0
      %1213 = vmatmul.mubr.bf16.gmra.mxu0 %v1143
      %v1214 = vpop.f32.mrf.mxu0
      %v1215 = vpop.f32.mrf.mxu0
      %v1216 = vpop.f32.mrf.mxu0
      %v1217 = vpop.f32.mrf.mxu0
      %1218 = vdwg.mxu0
      %s1219 = scalar_lea.vmem %s3, 8
      %v1220 = vld [vmem:[%s1219] sm:$0xf]
      %v1221 = vld [vmem:[%s1219 + $0x4] sm:$0x3]
      %v1224 = vunpack.c.l.b16 %v1220
      %v1225 = vunpack.c.l.b16 %v1221
      %v1226 = vpack.c.b16 %v1225, %v1224
      %v1228 = vsel %vm447, %v1226, 0
      %1230 = vmatprep.subr.bf16.mxu0 0
      %1231 = vmatpush1.bf16.msra.mxu0 0
      %1232 = vmatprep.subr.bf16.mxu0 0
      %1233 = vmatpush1.bf16.msra.mxu0 0
      %1234 = vmatprep.subr.bf16.mxu0 0
      %1235 = vmatpush1.bf16.msra.mxu0 0
      %1236 = vmatprep.subr.bf16.mxu0 0
      %1237 = vmatpush1.bf16.msra.mxu0 0
      %1238 = vmatprep.subr.bf16.mxu0 0
      %1239 = vmatpush1.bf16.msra.mxu0 0
      %1240 = vmatprep.subr.bf16.mxu0 0
      %1241 = vmatpush1.bf16.msra.mxu0 0
      %1242 = vmatprep.subr.bf16.mxu0 0
      %1243 = vmatpush1.bf16.msra.mxu0 0
      %1244 = vmatprep.subr.bf16.mxu0 0
      %1245 = vmatpush1.bf16.msra.mxu0 %v1228
      %1246 = vmatprep.subr.bf16.mxu0 0
      %1247 = vmatpush2.bf16.msra.mxu0 0
      %1248 = vmatprep.subr.bf16.mxu0 0
      %1249 = vmatpush2.bf16.msra.mxu0 0
      %1250 = vmatprep.subr.bf16.mxu0 0
      %1251 = vmatpush2.bf16.msra.mxu0 0
      %1252 = vmatprep.subr.bf16.mxu0 0
      %1253 = vmatpush2.bf16.msra.mxu0 0
      %1254 = vmatprep.subr.bf16.mxu0 0
      %1255 = vmatpush2.bf16.msra.mxu0 0
      %1256 = vmatprep.subr.bf16.mxu0 0
      %1257 = vmatpush2.bf16.msra.mxu0 0
      %1258 = vmatprep.subr.bf16.mxu0 0
      %1259 = vmatpush2.bf16.msra.mxu0 0
      %1260 = vmatprep.subr.bf16.mxu0 0
      %1261 = vmatpush2.bf16.msra.mxu0 0
      %1262 = vmatprep.mubr.bf16.mxu0 0
      %1263 = vmatmul.mubr.bf16.gmra.mxu0 %v1131
      %v1264 = vpop.f32.mrf.mxu0
      %v1265 = vpop.f32.mrf.mxu0
      %v1266 = vpop.f32.mrf.mxu0
      %v1267 = vadd.f32 0.0, %v1266
      %v1268 = vpop.f32.mrf.mxu0
      %1269 = vmatprep.mubr.bf16.mxu0 0
      %1270 = vmatmul.mubr.bf16.gmra.mxu0 %v1134
      %v1271 = vpop.f32.mrf.mxu0
      %v1272 = vadd.f32 0.0, %v1271
      %v1273 = vpop.f32.mrf.mxu0
      %v1274 = vpop.f32.mrf.mxu0
      %v1275 = vadd.f32 0.0, %v1274
      %v1276 = vpop.f32.mrf.mxu0
      %1277 = vmatprep.mubr.bf16.mxu0 0
      %1278 = vmatmul.mubr.bf16.gmra.mxu0 %v1137
      %v1279 = vpop.f32.mrf.mxu0
      %v1280 = vadd.f32 0.0, %v1279
      %v1281 = vpop.f32.mrf.mxu0
      %v1282 = vpop.f32.mrf.mxu0
      %v1283 = vadd.f32 0.0, %v1282
      %v1284 = vpop.f32.mrf.mxu0
      %1285 = vmatprep.mubr.bf16.mxu0 0
      %1286 = vmatmul.mubr.bf16.gmra.mxu0 %v1140
      %v1287 = vpop.f32.mrf.mxu0
      %v1288 = vadd.f32 0.0, %v1287
      %v1289 = vpop.f32.mrf.mxu0
      %v1290 = vpop.f32.mrf.mxu0
      %v1291 = vadd.f32 0.0, %v1290
      %v1292 = vpop.f32.mrf.mxu0
      %1293 = vmatprep.mubr.bf16.mxu0 0
      %1294 = vmatmul.mubr.bf16.gmra.mxu0 %v1143
      %v1295 = vpop.f32.mrf.mxu0
      %v1296 = vadd.f32 0.0, %v1295
      %v1297 = vpop.f32.mrf.mxu0
      %v1298 = vpop.f32.mrf.mxu0
      %v1299 = vpop.f32.mrf.mxu0
      %1300 = vdwg.mxu0
      %v1301 = vadd.f32 %v1183, %v1267
      %v1302 = vadd.f32 %v1186, %v1272
      %v1303 = vadd.f32 %v1191, %v1275
      %v1304 = vadd.f32 %v1194, %v1280
      %v1305 = vadd.f32 %v1199, %v1283
      %v1306 = vadd.f32 %v1202, %v1288
      %v1307 = vadd.f32 %v1207, %v1291
      %v1308 = vadd.f32 %v1210, %v1296
      %s1309 = scalar_lea.vmem %s3, 16
      %v1310 = vld [vmem:[%s1309] sm:$0xf]
      %v1311 = vld [vmem:[%s1309 + $0x4] sm:$0x3]
      %v1314 = vunpack.c.l.b16 %v1310
      %v1315 = vunpack.c.l.b16 %v1311
      %v1316 = vpack.c.b16 %v1315, %v1314
      %v1318 = vsel %vm447, %v1316, 0
      %1320 = vmatprep.subr.bf16.mxu0 0
      %1321 = vmatpush1.bf16.msra.mxu0 0
      %1322 = vmatprep.subr.bf16.mxu0 0
      %1323 = vmatpush1.bf16.msra.mxu0 0
      %1324 = vmatprep.subr.bf16.mxu0 0
      %1325 = vmatpush1.bf16.msra.mxu0 0
      %1326 = vmatprep.subr.bf16.mxu0 0
      %1327 = vmatpush1.bf16.msra.mxu0 0
      %1328 = vmatprep.subr.bf16.mxu0 0
      %1329 = vmatpush1.bf16.msra.mxu0 0
      %1330 = vmatprep.subr.bf16.mxu0 0
      %1331 = vmatpush1.bf16.msra.mxu0 0
      %1332 = vmatprep.subr.bf16.mxu0 0
      %1333 = vmatpush1.bf16.msra.mxu0 0
      %1334 = vmatprep.subr.bf16.mxu0 0
      %1335 = vmatpush1.bf16.msra.mxu0 %v1318
      %1336 = vmatprep.subr.bf16.mxu0 0
      %1337 = vmatpush2.bf16.msra.mxu0 0
      %1338 = vmatprep.subr.bf16.mxu0 0
      %1339 = vmatpush2.bf16.msra.mxu0 0
      %1340 = vmatprep.subr.bf16.mxu0 0
      %1341 = vmatpush2.bf16.msra.mxu0 0
      %1342 = vmatprep.subr.bf16.mxu0 0
      %1343 = vmatpush2.bf16.msra.mxu0 0
      %1344 = vmatprep.subr.bf16.mxu0 0
      %1345 = vmatpush2.bf16.msra.mxu0 0
      %1346 = vmatprep.subr.bf16.mxu0 0
      %1347 = vmatpush2.bf16.msra.mxu0 0
      %1348 = vmatprep.subr.bf16.mxu0 0
      %1349 = vmatpush2.bf16.msra.mxu0 0
      %1350 = vmatprep.subr.bf16.mxu0 0
      %1351 = vmatpush2.bf16.msra.mxu0 0
      %1352 = vmatprep.mubr.bf16.mxu0 0
      %1353 = vmatmul.mubr.bf16.gmra.mxu0 %v1131
      %v1354 = vpop.f32.mrf.mxu0
      %v1355 = vpop.f32.mrf.mxu0
      %v1356 = vpop.f32.mrf.mxu0
      %v1357 = vpop.f32.mrf.mxu0
      %1358 = vmatprep.mubr.bf16.mxu0 0
      %1359 = vmatmul.mubr.bf16.gmra.mxu0 %v1134
      %v1360 = vpop.f32.mrf.mxu0
      %v1361 = vadd.f32 0.0, %v1360
      %v1362 = vpop.f32.mrf.mxu0
      %v1363 = vpop.f32.mrf.mxu0
      %v1364 = vadd.f32 0.0, %v1363
      %v1365 = vpop.f32.mrf.mxu0
      %1366 = vmatprep.mubr.bf16.mxu0 0
      %1367 = vmatmul.mubr.bf16.gmra.mxu0 %v1137
      %v1368 = vpop.f32.mrf.mxu0
      %v1369 = vadd.f32 0.0, %v1368
      %v1370 = vpop.f32.mrf.mxu0
      %v1371 = vpop.f32.mrf.mxu0
      %v1372 = vadd.f32 0.0, %v1371
      %v1373 = vpop.f32.mrf.mxu0
      %1374 = vmatprep.mubr.bf16.mxu0 0
      %1375 = vmatmul.mubr.bf16.gmra.mxu0 %v1140
      %v1376 = vpop.f32.mrf.mxu0
      %v1377 = vadd.f32 0.0, %v1376
      %v1378 = vpop.f32.mrf.mxu0
      %v1379 = vpop.f32.mrf.mxu0
      %v1380 = vadd.f32 0.0, %v1379
      %v1381 = vpop.f32.mrf.mxu0
      %1382 = vmatprep.mubr.bf16.mxu0 0
      %1383 = vmatmul.mubr.bf16.gmra.mxu0 %v1143
      %v1384 = vpop.f32.mrf.mxu0
      %v1385 = vadd.f32 0.0, %v1384
      %v1386 = vpop.f32.mrf.mxu0
      %v1387 = vpop.f32.mrf.mxu0
      %v1388 = vadd.f32 0.0, %v1387
      %v1389 = vpop.f32.mrf.mxu0
      %1390 = vdwg.mxu0
      %v1391 = vadd.f32 %v1301, %v1361
      %v1392 = vadd.f32 %v1302, %v1364
      %v1393 = vadd.f32 %v1303, %v1369
      %v1394 = vadd.f32 %v1304, %v1372
      %v1395 = vadd.f32 %v1305, %v1377
      %v1396 = vadd.f32 %v1306, %v1380
      %v1397 = vadd.f32 %v1307, %v1385
      %v1398 = vadd.f32 %v1308, %v1388
      %1399 = vst [vmem:[%s257] sm:$0xff] %v1391
      %1400 = vst [vmem:[%s257 + $0x8] sm:$0xff] %v1392
      %1401 = vst [vmem:[%s257 + $0x10] sm:$0xff] %v1393
      %1402 = vst [vmem:[%s257 + $0x18] sm:$0xff] %v1394
      %1403 = vst [vmem:[%s257 + $0x20] sm:$0xff] %v1395
      %1404 = vst [vmem:[%s257 + $0x28] sm:$0xff] %v1396
      %1405 = vst [vmem:[%s257 + $0x30] sm:$0xff] %v1397
      %1406 = vst [vmem:[%s257 + $0x38] sm:$0xff] %v1398
      %p1407 = scmp.lt.s32.totalorder %s17, 1
      %s1408 = scalar_select %p1407, %s17, 1
      %s1409 = smul.addr %s1408, 32
      %s1410 = smul.addr %s1409, 8
      %s1411 = scalar_lea.vmem %s4, %s1410
      %p1412 = scmp.lt.s32.totalorder %s17, 1
      %s1413 = scalar_select %p1412, %s17, 1
      %s1414 = smul.addr %s1413, 8
      %s1415 = smul.addr %s1414, 8
      %s1416 = scalar_lea.vmem %s5, %s1415
      // Predicated region
      $region37: #{first_octave_conv.1} parent=35 // pred_check
        %p1417 = pneg %p129
      $region38: #{first_octave_conv.1} parent=35 // pred_check_branch
        %1419 = sbr.rel (%p1417) target = $region40
      $region39: #{first_octave_conv.1} parent=35 // pred_region
        _
      $region40: #{first_octave_conv.1} parent=35 // pred_fallthru
        _
      // Predicated region
      $region41: #{first_octave_conv.1} parent=35 // pred_check
        %p1420 = pneg %p155
      $region42: #{first_octave_conv.1} parent=35 // pred_check_branch
        %1422 = sbr.rel (%p1420) target = $region44
      $region43: #{first_octave_conv.1} parent=35 // pred_region
        _
      $region44: #{first_octave_conv.1} parent=35 // pred_fallthru
        _
    $region36: #{first_octave_conv.1} parent=5 // pred_fallthru
      _
    %p1423 = scmp.le.s32.totalorder 2, %s12
    // Predicated region
    $region45: #{first_octave_conv.1} parent=5 // pred_check
      %p1424 = pneg %p1423
    $region46: #{first_octave_conv.1} parent=5 // pred_check_branch
      %1426 = sbr.rel (%p1424) target = $region48
    $region47: #{first_octave_conv.1} parent=5 // pred_region
      %s1427 = ssub.s32 %s12, 2
      // Predicated region
      $region49: #{first_octave_conv.1} parent=47 // pred_check
        %p1428 = pneg %p135
      $region50: #{first_octave_conv.1} parent=47 // pred_check_branch
        %1430 = sbr.rel (%p1428) target = $region52
      $region51: #{first_octave_conv.1} parent=47 // pred_region
        %p1431 = scmp.lt.s32.totalorder %s18, 1
        %s1432 = scalar_select %p1431, %s18, 1
        %s1433 = smul.addr %s1432, 32
        %s1434 = smul.addr %s1433, 8
        %s1435 = scalar_lea.vmem %s4, %s1434
      $region52: #{first_octave_conv.1} parent=47 // pred_fallthru
        _
      // Predicated region
      $region53: #{first_octave_conv.1} parent=47 // pred_check
        %p1436 = pneg %p161
      $region54: #{first_octave_conv.1} parent=47 // pred_check_branch
        %1438 = sbr.rel (%p1436) target = $region56
      $region55: #{first_octave_conv.1} parent=47 // pred_region
        %p1439 = scmp.lt.s32.totalorder %s18, 1
        %s1440 = scalar_select %p1439, %s18, 1
        %s1441 = smul.addr %s1440, 8
        %s1442 = smul.addr %s1441, 8
        %s1443 = scalar_lea.vmem %s5, %s1442
      $region56: #{first_octave_conv.1} parent=47 // pred_fallthru
        _
    $region48: #{first_octave_conv.1} parent=5 // pred_fallthru
      _
  $region6: #{first_octave_conv.1} parent=0 // loop_footer
    %s16 = sadd.s32 1, %s12
  $region7: #{first_octave_conv.1} parent=0 // loop_footer_branch
    %11 = sbr.rel target = $region3
  $region8: #{first_octave_conv.1} parent=0 // loop_exit
    _

</llo_original>
